<compile_context>
chip_gen: v5e
topology: v5e:2x2
jax: 0.10.0
libtpu: 0.0.40
codegen_flags: <defaults>
</compile_context>

<pallas_src>
import numpy as np
import jax
import jax.numpy as jnp
from jax import lax
from jax.experimental import pallas as pl
from jax.experimental.pallas import tpu as pltpu

# ----------------------------- model config ---------------------------------
HIDDEN = 32            # hidden_channels
HEADS = 2              # GATConv heads
HC = HEADS * HIDDEN    # concat=True output width of each GATConv
OUT_CHANNELS = 8
SBERT_DIM = 32
NUM_LAYERS = 2
LEAKY_SLOPE = 0.2
LN_EPS = 1e-5
NEG_BIG = -1e30

NODE_TYPES = ("job", "skill")
EDGE_TYPES = (("job", "requires", "skill"),      # bipartite
              ("skill", "rev_requires", "job"),  # bipartite
              ("job", "similar", "job"))         # non-bipartite -> self loops
NODE_INPUT_DIMS = {"job": 12, "skill": 10}
NUM_NODES = {"job": 16, "skill": 8}
NUM_QUERIES_PAD = 8    # query batch padded to this many rows (>= actual Q)


# Static column layout of the per-node-type packed projection matrices:
#   [ w_src(et) (64 cols) for every edge type with src == nt |
#     folded att_dst(et) (2 cols) for every edge type with dst == nt ]
def _build_pack_layout():
    h_col, a_col, width = {}, {}, {nt: 0 for nt in NODE_TYPES}
    for et in EDGE_TYPES:
        h_col[et] = width[et[0]]
        width[et[0]] += HC
    for et in EDGE_TYPES:
        a_col[et] = width[et[2]]
        width[et[2]] += HEADS
    return h_col, a_col, width


H_COL, A_COL, PACK_WIDTH = _build_pack_layout()


# ----------------------------- fused kernel ----------------------------------
def _gat_edge(h_src, a_dst2, x_src, att_stk, neg_stk, edge_stk, bias, nd):
    """Dense-mask GATConv (PyG semantics), both heads in one stacked pass.

    h_src:   [Ns, HC]      packed source projection (both heads, lane-concat)
    a_dst2:  [Nd, 2]       per-destination attention logits (one col per head)
    x_src:   [Ns, HIDDEN]  raw hidden source features
    att_stk: [2*Nd, HIDDEN] host-folded att_src (head0 rows, then head1 rows)
    neg_stk / edge_stk: [2*Nd, Ns] additive -1e30 mask / 0-1 zero-guard
    Returns [Nd, HC] (heads concatenated) + bias.
    """
    # Per-source logits for both heads, already stacked per destination block.
    a_src = lax.dot_general(att_stk, x_src, (((1,), (1,)), ((), ())),
                            preferred_element_type=jnp.float32)       # [2Nd, Ns]
    # Per-destination logits: head-0 rows then head-1 rows.
    a_dst = jnp.concatenate([a_dst2[:, 0:1], a_dst2[:, 1:2]], axis=0)  # [2Nd, 1]

    e = a_src + a_dst
    e = jnp.maximum(e, LEAKY_SLOPE * e)            # LeakyReLU(0.2)
    e = e + neg_stk                                # -1e30 on non-edges
    m = jnp.max(e, axis=-1, keepdims=True)
    p = jnp.exp(e - m) * edge_stk                  # zero-guard: isolated dst -> 0
    denom = jnp.maximum(jnp.sum(p, axis=-1, keepdims=True), 1e-16)
    alpha = p * pl.reciprocal(denom, approx=True)  # attention dropout = identity

    msg = jnp.dot(alpha, h_src, preferred_element_type=jnp.float32)   # [2Nd, HC]
    out = jnp.concatenate([msg[0:nd, 0:HIDDEN], msg[nd:2 * nd, HIDDEN:HC]],
                          axis=-1)                                     # [Nd, HC]
    return out + bias


def _forward_body(v, out_job_ref, out_q_ref):
    prm = v["p"]

    # Initial per-node-type encoder: Linear -> LayerNorm -> ReLU (dropout=id).
    x = {}
    for nt in NODE_TYPES:
        ip = prm["init"][nt]
        y = jnp.dot(v["x"][nt], ip["w"], preferred_element_type=jnp.float32) + ip["b"]
        mu = jnp.mean(y, axis=-1, keepdims=True)
        var = jnp.mean(jnp.square(y - mu), axis=-1, keepdims=True)
        y = (y - mu) * lax.rsqrt(var + LN_EPS)
        x[nt] = jnp.maximum(y * ip["gamma"] + ip["beta"], 0.0)

    # GNN layers: HeteroConv(GATConv, aggr='sum') then Linear(2H -> H) + ReLU.
    for layer in range(NUM_LAYERS):
        lp = prm["layers"][layer]
        # ONE packed lane-dense projection matmul per node type: produces every
        # edge type's h_src and the folded per-destination attention logits.
        y = {nt: jnp.dot(x[nt], lp["wpack"][nt], preferred_element_type=jnp.float32)
             for nt in NODE_TYPES}

        updates = {nt: None for nt in NODE_TYPES}
        for et in EDGE_TYPES:
            src, _, dst = et
            h_src = y[src][:, H_COL[et]:H_COL[et] + HC]
            a_dst2 = y[dst][:, A_COL[et]:A_COL[et] + HEADS]
            out = _gat_edge(h_src, a_dst2, x[src], lp["att_stk"][et],
                            v["neg"][et], v["edge"][et], lp["bias"][et],
                            NUM_NODES[dst])
            # HeteroConv aggr='sum' accumulated in registers.
            updates[dst] = out if updates[dst] is None else updates[dst] + out

        for nt in NODE_TYPES:
            it = lp["inter"][nt]
            x[nt] = jnp.maximum(
                jnp.dot(updates[nt], it["w"], preferred_element_type=jnp.float32)
                + it["b"], 0.0)

    # Final projections + batched query scoring (one MXU matmul).
    jf = prm["job_final"]
    job_emb = jnp.dot(x["job"], jf["w"], preferred_element_type=jnp.float32) + jf["b"]
    qf = prm["query_final"]
    q_proj = jnp.dot(v["q"], qf["w"], preferred_element_type=jnp.float32) + qf["b"]
    scores = lax.dot_general(job_emb, q_proj, (((1,), (1,)), ((), ())),
                             preferred_element_type=jnp.float32)       # [NJ, Qp]

    # Packed, lane-contiguous stores (job_emb | scores) and q_proj.
    out_job_ref[...] = jnp.concatenate([job_emb, scores], axis=-1)
    out_q_ref[...] = q_proj


# ----------------------------- host-side packing -----------------------------
def _fold_att(w, att):
    """Fold a per-head attention vector through a projection: [HIDDEN, HEADS]."""
    cols = [w[:, h * HIDDEN:(h + 1) * HIDDEN]
            @ att[0, h * HIDDEN:(h + 1) * HIDDEN][:, None] for h in range(HEADS)]
    return jnp.concatenate(cols, axis=1)


def pack_params(params):
    """Re-layout PyTorch-structured params into the kernel's packed form.

    Runs in the wrapper (outside the kernel): packed projections, folded
    attention vectors, head-stacked att_src — no constant work in-kernel.
    """
    layers = []
    for layer in range(NUM_LAYERS):
        conv = params["convs"][layer]
        blocks = {nt: [] for nt in NODE_TYPES}
        for et in EDGE_TYPES:                       # source-side projections
            blocks[et[0]].append(conv[et]["w_src"])
        for et in EDGE_TYPES:                       # folded destination logits
            src, _, dst = et
            w_d = conv[et]["w_src"] if src == dst else conv[et]["w_dst"]
            blocks[dst].append(_fold_att(w_d, conv[et]["att_dst"]))
        wpack = {nt: jnp.concatenate(blocks[nt], axis=1) for nt in NODE_TYPES}

        att_stk, bias = {}, {}
        for et in EDGE_TYPES:
            _, _, dst = et
            a_src = _fold_att(conv[et]["w_src"], conv[et]["att_src"])  # [HID, 2]
            att_stk[et] = jnp.concatenate(
                [jnp.tile(a_src[:, h][None, :], (NUM_NODES[dst], 1))
                 for h in range(HEADS)], axis=0)                       # [2Nd, HID]
            bias[et] = conv[et]["bias"]
        layers.append(dict(wpack=wpack, att_stk=att_stk, bias=bias,
                           inter=params["inter"][layer]))
    return dict(init=params["init"], layers=layers,
                job_final=params["job_final"], query_final=params["query_final"])


def hetero_gnn_forward(params, x_dict_input, adj_dict, query_sbert):
    """Whole forward pass (all layers, all edge types, scoring) = ONE pallas_call.

    query_sbert: [Q, SBERT_DIM] batch (or a single [SBERT_DIM] vector).
    Returns (job_scores [Q, num_jobs], job_emb [num_jobs, out], q_proj [Q, out]).
    """
    f32 = jnp.float32
    q = jnp.atleast_2d(jnp.asarray(query_sbert, f32))
    nq = q.shape[0]
    assert nq <= NUM_QUERIES_PAD, "increase NUM_QUERIES_PAD for larger batches"
    q_pad = jnp.zeros((NUM_QUERIES_PAD, SBERT_DIM), f32).at[:nq].set(q)

    # Pre-stacked edge masks (additive bias + zero-guard), both heads.
    neg, edge = {}, {}
    for et in EDGE_TYPES:
        e1 = (jnp.asarray(adj_dict[et], f32) > 0).astype(f32)
        neg[et] = jnp.tile((1.0 - e1) * NEG_BIG, (HEADS, 1))
        edge[et] = jnp.tile(e1, (HEADS, 1))

    inputs = {"x": {nt: jnp.asarray(x_dict_input[nt], f32) for nt in NODE_TYPES},
              "neg": neg, "edge": edge, "q": q_pad, "p": pack_params(params)}
    flat, treedef = jax.tree_util.tree_flatten(inputs)
    n_in = len(flat)

    def kernel(*refs):
        vals = jax.tree_util.tree_map(
            lambda r: r[...], jax.tree_util.tree_unflatten(treedef, refs[:n_in]))
        _forward_body(vals, *refs[n_in:])

    nj = NUM_NODES["job"]
    out_job, out_q = pl.pallas_call(
        kernel,
        out_shape=(jax.ShapeDtypeStruct((nj, OUT_CHANNELS + NUM_QUERIES_PAD), f32),
                   jax.ShapeDtypeStruct((NUM_QUERIES_PAD, OUT_CHANNELS), f32)),
        in_specs=[pl.BlockSpec(memory_space=pltpu.MemorySpace.VMEM)] * n_in,
        out_specs=(pl.BlockSpec(memory_space=pltpu.MemorySpace.VMEM),
                   pl.BlockSpec(memory_space=pltpu.MemorySpace.VMEM)),
    )(*flat)

    job_emb = out_job[:, :OUT_CHANNELS]
    job_scores = out_job[:, OUT_CHANNELS:OUT_CHANNELS + nq].T   # [Q, num_jobs]
    q_proj = out_q[:nq]
    return job_scores, job_emb, q_proj


# ----------------------------- parameters ------------------------------------
def _glorot(key, shape):
    fan_in, fan_out = shape[-2], shape[-1]
    lim = float(np.sqrt(6.0 / (fan_in + fan_out)))
    return jax.random.uniform(key, shape, jnp.float32, -lim, lim)


def init_params(key):
    keys = iter(jax.random.split(key, 256))
    params = {"init": {}, "convs": [], "inter": []}
    for nt in NODE_TYPES:
        params["init"][nt] = dict(
            w=_glorot(next(keys), (NODE_INPUT_DIMS[nt], HIDDEN)),
            b=jnp.zeros((1, HIDDEN), jnp.float32),
            gamma=jnp.ones((1, HIDDEN), jnp.float32),
            beta=jnp.zeros((1, HIDDEN), jnp.float32))
    for _ in range(NUM_LAYERS):
        conv = {}
        for et in EDGE_TYPES:
            src, _, dst = et
            d = dict(w_src=_glorot(next(keys), (HIDDEN, HC)),
                     att_src=_glorot(next(keys), (1, HC)),
                     att_dst=_glorot(next(keys), (1, HC)),
                     bias=jnp.zeros((1, HC), jnp.float32))
            if src != dst:
                # Bipartite edges have a separate destination projection; the
                # homogeneous edge uses lin_src for both sides (PyG path), so
                # its w_dst is never created / DMA'd.
                d["w_dst"] = _glorot(next(keys), (HIDDEN, HC))
            conv[et] = d
        params["convs"].append(conv)
        params["inter"].append({nt: dict(w=_glorot(next(keys), (HC, HIDDEN)),
                                         b=jnp.zeros((1, HIDDEN), jnp.float32))
                                for nt in NODE_TYPES})
    params["job_final"] = dict(w=_glorot(next(keys), (HIDDEN, OUT_CHANNELS)),
                               b=jnp.zeros((1, OUT_CHANNELS), jnp.float32))
    params["query_final"] = dict(w=_glorot(next(keys), (SBERT_DIM, OUT_CHANNELS)),
                                 b=jnp.zeros((1, OUT_CHANNELS), jnp.float32))
    return params


# ----------------------------- synthetic graph --------------------------------
def build_adjacency():
    nj, ns = NUM_NODES["job"], NUM_NODES["skill"]
    a_js = np.zeros((ns, nj), np.float32)   # dst=skill, src=job
    a_sj = np.zeros((nj, ns), np.float32)   # dst=job,   src=skill
    a_jj = np.zeros((nj, nj), np.float32)   # dst=job,   src=job
    for j in range(nj):
        for s in (j % ns, (j + 3) % ns):
            a_js[s, j] = 1.0
            a_sj[j, s] = 1.0
        a_jj[(j + 1) % nj, j] = 1.0
    np.fill_diagonal(a_jj, 1.0)             # add_self_loops for the homo edge
    return {("job", "requires", "skill"): jnp.asarray(a_js),
            ("skill", "rev_requires", "job"): jnp.asarray(a_sj),
            ("job", "similar", "job"): jnp.asarray(a_jj)}


# ----------------------------- pure-JAX reference -----------------------------
def reference_forward(params, x_dict_input, adj_dict, queries):
    """Unpacked, per-head reference (exact softmax) to validate the fused kernel."""
    x = {}
    for nt in NODE_TYPES:
        p = params["init"][nt]
        y = x_dict_input[nt] @ p["w"] + p["b"]
        mu = y.mean(-1, keepdims=True)
        var = ((y - mu) ** 2).mean(-1, keepdims=True)
        x[nt] = jax.nn.relu((y - mu) / jnp.sqrt(var + LN_EPS) * p["gamma"] + p["beta"])
    for layer in range(NUM_LAYERS):
        upd = {nt: None for nt in NODE_TYPES}
        for et in EDGE_TYPES:
            src, _, dst = et
            cp = params["convs"][layer][et]
            hs = x[src] @ cp["w_src"]
            hd = hs if src == dst else x[dst] @ cp["w_dst"]
            adj = adj_dict[et] > 0
            outs = []
            for h in range(HEADS):
                sl = slice(h * HIDDEN, (h + 1) * HIDDEN)
                a_s = hs[:, sl] @ cp["att_src"][0, sl]
                a_d = hd[:, sl] @ cp["att_dst"][0, sl]
                e = a_d[:, None] + a_s[None, :]
                e = jnp.where(e > 0, e, LEAKY_SLOPE * e)
                e = jnp.where(adj, e, NEG_BIG)
                p_ = jnp.where(adj, jnp.exp(e - jnp.max(e, -1, keepdims=True)), 0.0)
                alpha = p_ / jnp.maximum(p_.sum(-1, keepdims=True), 1e-16)
                outs.append(alpha @ hs[:, sl])
            out = jnp.concatenate(outs, -1) + cp["bias"]
            upd[dst] = out if upd[dst] is None else upd[dst] + out
        for nt in NODE_TYPES:
            ip = params["inter"][layer][nt]
            x[nt] = jax.nn.relu(upd[nt] @ ip["w"] + ip["b"])
    job_emb = x["job"] @ params["job_final"]["w"] + params["job_final"]["b"]
    q_proj = queries @ params["query_final"]["w"] + params["query_final"]["b"]
    return q_proj @ job_emb.T, job_emb, q_proj


# ----------------------------- main -------------------------------------------
if __name__ == "__main__":
    key = jax.random.PRNGKey(0)
    k_par, k_job, k_skill, k_q = jax.random.split(key, 4)

    params = init_params(k_par)
    x_dict_input = {
        "job": jax.random.normal(
            k_job, (NUM_NODES["job"], NODE_INPUT_DIMS["job"]), jnp.float32),
        "skill": jax.random.normal(
            k_skill, (NUM_NODES["skill"], NODE_INPUT_DIMS["skill"]), jnp.float32),
    }
    num_queries = 4
    queries = jax.random.normal(k_q, (num_queries, SBERT_DIM), jnp.float32)
    adj_dict = build_adjacency()

    fwd = jax.jit(hetero_gnn_forward)
    job_scores, job_emb, q_proj = fwd(params, x_dict_input, adj_dict, queries)
    jax.block_until_ready((job_scores, job_emb, q_proj))

    assert job_scores.shape == (num_queries, NUM_NODES["job"])
    assert job_emb.shape == (NUM_NODES["job"], OUT_CHANNELS)
    assert q_proj.shape == (num_queries, OUT_CHANNELS)
    assert bool(jnp.all(jnp.isfinite(job_scores)))
    assert bool(jnp.all(jnp.isfinite(job_emb)))

    ref_scores, ref_emb, ref_q = reference_forward(params, x_dict_input, adj_dict, queries)
    assert bool(jnp.allclose(job_emb, ref_emb, rtol=1e-2, atol=1e-2))
    assert bool(jnp.allclose(q_proj, ref_q, rtol=1e-2, atol=1e-2))
    assert bool(jnp.allclose(job_scores, ref_scores, rtol=1e-2, atol=1e-2))
    print("KERNEL_OK")
</pallas_src>

<mosaic_0001>
module attributes {stable_mosaic.version = 11 : i64} {
  func.func @kernel(%arg0: memref<16x16xf32, #tpu.memory_space<vmem>>, %arg1: memref<32x16xf32, #tpu.memory_space<vmem>>, %arg2: memref<32x8xf32, #tpu.memory_space<vmem>>, %arg3: memref<16x16xf32, #tpu.memory_space<vmem>>, %arg4: memref<32x16xf32, #tpu.memory_space<vmem>>, %arg5: memref<32x8xf32, #tpu.memory_space<vmem>>, %arg6: memref<1x32xf32, #tpu.memory_space<vmem>>, %arg7: memref<1x32xf32, #tpu.memory_space<vmem>>, %arg8: memref<1x32xf32, #tpu.memory_space<vmem>>, %arg9: memref<12x32xf32, #tpu.memory_space<vmem>>, %arg10: memref<1x32xf32, #tpu.memory_space<vmem>>, %arg11: memref<1x32xf32, #tpu.memory_space<vmem>>, %arg12: memref<1x32xf32, #tpu.memory_space<vmem>>, %arg13: memref<10x32xf32, #tpu.memory_space<vmem>>, %arg14: memref<1x8xf32, #tpu.memory_space<vmem>>, %arg15: memref<32x8xf32, #tpu.memory_space<vmem>>, %arg16: memref<16x32xf32, #tpu.memory_space<vmem>>, %arg17: memref<32x32xf32, #tpu.memory_space<vmem>>, %arg18: memref<32x32xf32, #tpu.memory_space<vmem>>, %arg19: memref<1x64xf32, #tpu.memory_space<vmem>>, %arg20: memref<1x64xf32, #tpu.memory_space<vmem>>, %arg21: memref<1x64xf32, #tpu.memory_space<vmem>>, %arg22: memref<1x32xf32, #tpu.memory_space<vmem>>, %arg23: memref<64x32xf32, #tpu.memory_space<vmem>>, %arg24: memref<1x32xf32, #tpu.memory_space<vmem>>, %arg25: memref<64x32xf32, #tpu.memory_space<vmem>>, %arg26: memref<32x132xf32, #tpu.memory_space<vmem>>, %arg27: memref<32x66xf32, #tpu.memory_space<vmem>>, %arg28: memref<16x32xf32, #tpu.memory_space<vmem>>, %arg29: memref<32x32xf32, #tpu.memory_space<vmem>>, %arg30: memref<32x32xf32, #tpu.memory_space<vmem>>, %arg31: memref<1x64xf32, #tpu.memory_space<vmem>>, %arg32: memref<1x64xf32, #tpu.memory_space<vmem>>, %arg33: memref<1x64xf32, #tpu.memory_space<vmem>>, %arg34: memref<1x32xf32, #tpu.memory_space<vmem>>, %arg35: memref<64x32xf32, #tpu.memory_space<vmem>>, %arg36: memref<1x32xf32, #tpu.memory_space<vmem>>, %arg37: memref<64x32xf32, #tpu.memory_space<vmem>>, %arg38: memref<32x132xf32, #tpu.memory_space<vmem>>, %arg39: memref<32x66xf32, #tpu.memory_space<vmem>>, %arg40: memref<1x8xf32, #tpu.memory_space<vmem>>, %arg41: memref<32x8xf32, #tpu.memory_space<vmem>>, %arg42: memref<8x32xf32, #tpu.memory_space<vmem>>, %arg43: memref<16x12xf32, #tpu.memory_space<vmem>>, %arg44: memref<8x10xf32, #tpu.memory_space<vmem>>, %arg45: memref<16x16xf32, #tpu.memory_space<vmem>>, %arg46: memref<8x8xf32, #tpu.memory_space<vmem>>) attributes {dimension_semantics = [], scalar_prefetch = 0 : i64, scratch_operands = 0 : i64, tpu.core_type = #tpu.core_type<tc>} {
    %c0 = arith.constant 0 : index
    %c0_0 = arith.constant 0 : index
    %0 = vector.load %arg0[%c0, %c0_0] : memref<16x16xf32, #tpu.memory_space<vmem>>, vector<16x16xf32>
    %c0_1 = arith.constant 0 : index
    %c0_2 = arith.constant 0 : index
    %1 = vector.load %arg1[%c0_1, %c0_2] : memref<32x16xf32, #tpu.memory_space<vmem>>, vector<32x16xf32>
    %c0_3 = arith.constant 0 : index
    %c0_4 = arith.constant 0 : index
    %2 = vector.load %arg2[%c0_3, %c0_4] : memref<32x8xf32, #tpu.memory_space<vmem>>, vector<32x8xf32>
    %c0_5 = arith.constant 0 : index
    %c0_6 = arith.constant 0 : index
    %3 = vector.load %arg3[%c0_5, %c0_6] : memref<16x16xf32, #tpu.memory_space<vmem>>, vector<16x16xf32>
    %c0_7 = arith.constant 0 : index
    %c0_8 = arith.constant 0 : index
    %4 = vector.load %arg4[%c0_7, %c0_8] : memref<32x16xf32, #tpu.memory_space<vmem>>, vector<32x16xf32>
    %c0_9 = arith.constant 0 : index
    %c0_10 = arith.constant 0 : index
    %5 = vector.load %arg5[%c0_9, %c0_10] : memref<32x8xf32, #tpu.memory_space<vmem>>, vector<32x8xf32>
    %c0_11 = arith.constant 0 : index
    %c0_12 = arith.constant 0 : index
    %6 = vector.load %arg6[%c0_11, %c0_12] : memref<1x32xf32, #tpu.memory_space<vmem>>, vector<1x32xf32>
    %c0_13 = arith.constant 0 : index
    %c0_14 = arith.constant 0 : index
    %7 = vector.load %arg7[%c0_13, %c0_14] : memref<1x32xf32, #tpu.memory_space<vmem>>, vector<1x32xf32>
    %c0_15 = arith.constant 0 : index
    %c0_16 = arith.constant 0 : index
    %8 = vector.load %arg8[%c0_15, %c0_16] : memref<1x32xf32, #tpu.memory_space<vmem>>, vector<1x32xf32>
    %c0_17 = arith.constant 0 : index
    %c0_18 = arith.constant 0 : index
    %9 = vector.load %arg9[%c0_17, %c0_18] : memref<12x32xf32, #tpu.memory_space<vmem>>, vector<12x32xf32>
    %c0_19 = arith.constant 0 : index
    %c0_20 = arith.constant 0 : index
    %10 = vector.load %arg10[%c0_19, %c0_20] : memref<1x32xf32, #tpu.memory_space<vmem>>, vector<1x32xf32>
    %c0_21 = arith.constant 0 : index
    %c0_22 = arith.constant 0 : index
    %11 = vector.load %arg11[%c0_21, %c0_22] : memref<1x32xf32, #tpu.memory_space<vmem>>, vector<1x32xf32>
    %c0_23 = arith.constant 0 : index
    %c0_24 = arith.constant 0 : index
    %12 = vector.load %arg12[%c0_23, %c0_24] : memref<1x32xf32, #tpu.memory_space<vmem>>, vector<1x32xf32>
    %c0_25 = arith.constant 0 : index
    %c0_26 = arith.constant 0 : index
    %13 = vector.load %arg13[%c0_25, %c0_26] : memref<10x32xf32, #tpu.memory_space<vmem>>, vector<10x32xf32>
    %c0_27 = arith.constant 0 : index
    %c0_28 = arith.constant 0 : index
    %14 = vector.load %arg14[%c0_27, %c0_28] : memref<1x8xf32, #tpu.memory_space<vmem>>, vector<1x8xf32>
    %c0_29 = arith.constant 0 : index
    %c0_30 = arith.constant 0 : index
    %15 = vector.load %arg15[%c0_29, %c0_30] : memref<32x8xf32, #tpu.memory_space<vmem>>, vector<32x8xf32>
    %c0_31 = arith.constant 0 : index
    %c0_32 = arith.constant 0 : index
    %16 = vector.load %arg16[%c0_31, %c0_32] : memref<16x32xf32, #tpu.memory_space<vmem>>, vector<16x32xf32>
    %c0_33 = arith.constant 0 : index
    %c0_34 = arith.constant 0 : index
    %17 = vector.load %arg17[%c0_33, %c0_34] : memref<32x32xf32, #tpu.memory_space<vmem>>, vector<32x32xf32>
    %c0_35 = arith.constant 0 : index
    %c0_36 = arith.constant 0 : index
    %18 = vector.load %arg18[%c0_35, %c0_36] : memref<32x32xf32, #tpu.memory_space<vmem>>, vector<32x32xf32>
    %c0_37 = arith.constant 0 : index
    %c0_38 = arith.constant 0 : index
    %19 = vector.load %arg19[%c0_37, %c0_38] : memref<1x64xf32, #tpu.memory_space<vmem>>, vector<1x64xf32>
    %c0_39 = arith.constant 0 : index
    %c0_40 = arith.constant 0 : index
    %20 = vector.load %arg20[%c0_39, %c0_40] : memref<1x64xf32, #tpu.memory_space<vmem>>, vector<1x64xf32>
    %c0_41 = arith.constant 0 : index
    %c0_42 = arith.constant 0 : index
    %21 = vector.load %arg21[%c0_41, %c0_42] : memref<1x64xf32, #tpu.memory_space<vmem>>, vector<1x64xf32>
    %c0_43 = arith.constant 0 : index
    %c0_44 = arith.constant 0 : index
    %22 = vector.load %arg22[%c0_43, %c0_44] : memref<1x32xf32, #tpu.memory_space<vmem>>, vector<1x32xf32>
    %c0_45 = arith.constant 0 : index
    %c0_46 = arith.constant 0 : index
    %23 = vector.load %arg23[%c0_45, %c0_46] : memref<64x32xf32, #tpu.memory_space<vmem>>, vector<64x32xf32>
    %c0_47 = arith.constant 0 : index
    %c0_48 = arith.constant 0 : index
    %24 = vector.load %arg24[%c0_47, %c0_48] : memref<1x32xf32, #tpu.memory_space<vmem>>, vector<1x32xf32>
    %c0_49 = arith.constant 0 : index
    %c0_50 = arith.constant 0 : index
    %25 = vector.load %arg25[%c0_49, %c0_50] : memref<64x32xf32, #tpu.memory_space<vmem>>, vector<64x32xf32>
    %c0_51 = arith.constant 0 : index
    %c0_52 = arith.constant 0 : index
    %26 = vector.load %arg26[%c0_51, %c0_52] : memref<32x132xf32, #tpu.memory_space<vmem>>, vector<32x132xf32>
    %c0_53 = arith.constant 0 : index
    %c0_54 = arith.constant 0 : index
    %27 = vector.load %arg27[%c0_53, %c0_54] : memref<32x66xf32, #tpu.memory_space<vmem>>, vector<32x66xf32>
    %c0_55 = arith.constant 0 : index
    %c0_56 = arith.constant 0 : index
    %28 = vector.load %arg29[%c0_55, %c0_56] : memref<32x32xf32, #tpu.memory_space<vmem>>, vector<32x32xf32>
    %c0_57 = arith.constant 0 : index
    %c0_58 = arith.constant 0 : index
    %29 = vector.load %arg30[%c0_57, %c0_58] : memref<32x32xf32, #tpu.memory_space<vmem>>, vector<32x32xf32>
    %c0_59 = arith.constant 0 : index
    %c0_60 = arith.constant 0 : index
    %30 = vector.load %arg32[%c0_59, %c0_60] : memref<1x64xf32, #tpu.memory_space<vmem>>, vector<1x64xf32>
    %c0_61 = arith.constant 0 : index
    %c0_62 = arith.constant 0 : index
    %31 = vector.load %arg33[%c0_61, %c0_62] : memref<1x64xf32, #tpu.memory_space<vmem>>, vector<1x64xf32>
    %c0_63 = arith.constant 0 : index
    %c0_64 = arith.constant 0 : index
    %32 = vector.load %arg34[%c0_63, %c0_64] : memref<1x32xf32, #tpu.memory_space<vmem>>, vector<1x32xf32>
    %c0_65 = arith.constant 0 : index
    %c0_66 = arith.constant 0 : index
    %33 = vector.load %arg35[%c0_65, %c0_66] : memref<64x32xf32, #tpu.memory_space<vmem>>, vector<64x32xf32>
    %c0_67 = arith.constant 0 : index
    %c0_68 = arith.constant 0 : index
    %34 = vector.load %arg38[%c0_67, %c0_68] : memref<32x132xf32, #tpu.memory_space<vmem>>, vector<32x132xf32>
    %c0_69 = arith.constant 0 : index
    %c0_70 = arith.constant 0 : index
    %35 = vector.load %arg39[%c0_69, %c0_70] : memref<32x66xf32, #tpu.memory_space<vmem>>, vector<32x66xf32>
    %c0_71 = arith.constant 0 : index
    %c0_72 = arith.constant 0 : index
    %36 = vector.load %arg40[%c0_71, %c0_72] : memref<1x8xf32, #tpu.memory_space<vmem>>, vector<1x8xf32>
    %c0_73 = arith.constant 0 : index
    %c0_74 = arith.constant 0 : index
    %37 = vector.load %arg41[%c0_73, %c0_74] : memref<32x8xf32, #tpu.memory_space<vmem>>, vector<32x8xf32>
    %c0_75 = arith.constant 0 : index
    %c0_76 = arith.constant 0 : index
    %38 = vector.load %arg42[%c0_75, %c0_76] : memref<8x32xf32, #tpu.memory_space<vmem>>, vector<8x32xf32>
    %c0_77 = arith.constant 0 : index
    %c0_78 = arith.constant 0 : index
    %39 = vector.load %arg43[%c0_77, %c0_78] : memref<16x12xf32, #tpu.memory_space<vmem>>, vector<16x12xf32>
    %c0_79 = arith.constant 0 : index
    %c0_80 = arith.constant 0 : index
    %40 = vector.load %arg44[%c0_79, %c0_80] : memref<8x10xf32, #tpu.memory_space<vmem>>, vector<8x10xf32>
    %cst = arith.constant dense<0.000000e+00> : vector<16x32xf32>
    %41 = tpu.matmul %39, %9, %cst {dimension_numbers = #tpu.dot_dimension_numbers<[1], [0], [0], [1], [0, 0, 1, 1], [], []>} : vector<16x12xf32>, vector<12x32xf32>, vector<16x32xf32> -> vector<16x32xf32>
    %42 = vector.broadcast %6 : vector<1x32xf32> to vector<16x32xf32>
    %43 = arith.addf %41, %42 : vector<16x32xf32>
    %cst_81 = arith.constant dense<0.000000e+00> : vector<16xf32>
    %44 = vector.multi_reduction <add>, %43, %cst_81 [1] : vector<16x32xf32> to vector<16xf32>
    %45 = vector.shape_cast %44 : vector<16xf32> to vector<16x1xf32>
    %cst_82 = arith.constant 3.200000e+01 : f32
    %46 = vector.broadcast %cst_82 : f32 to vector<16x1xf32>
    %47 = arith.divf %45, %46 : vector<16x1xf32>
    %48 = vector.broadcast %47 : vector<16x1xf32> to vector<16x32xf32>
    %49 = arith.subf %43, %48 : vector<16x32xf32>
    %50 = arith.mulf %49, %49 : vector<16x32xf32>
    %cst_83 = arith.constant dense<0.000000e+00> : vector<16xf32>
    %51 = vector.multi_reduction <add>, %50, %cst_83 [1] : vector<16x32xf32> to vector<16xf32>
    %52 = vector.shape_cast %51 : vector<16xf32> to vector<16x1xf32>
    %cst_84 = arith.constant 3.200000e+01 : f32
    %53 = vector.broadcast %cst_84 : f32 to vector<16x1xf32>
    %54 = arith.divf %52, %53 : vector<16x1xf32>
    %55 = vector.broadcast %47 : vector<16x1xf32> to vector<16x32xf32>
    %56 = arith.subf %43, %55 : vector<16x32xf32>
    %cst_85 = arith.constant 9.99999974E-6 : f32
    %57 = vector.broadcast %cst_85 : f32 to vector<16x1xf32>
    %58 = arith.addf %54, %57 : vector<16x1xf32>
    %59 = math.rsqrt %58 : vector<16x1xf32>
    %60 = vector.broadcast %59 : vector<16x1xf32> to vector<16x32xf32>
    %61 = arith.mulf %56, %60 : vector<16x32xf32>
    %62 = vector.broadcast %8 : vector<1x32xf32> to vector<16x32xf32>
    %63 = arith.mulf %61, %62 : vector<16x32xf32>
    %64 = vector.broadcast %7 : vector<1x32xf32> to vector<16x32xf32>
    %65 = arith.addf %63, %64 : vector<16x32xf32>
    %cst_86 = arith.constant 0.000000e+00 : f32
    %66 = vector.broadcast %cst_86 : f32 to vector<16x32xf32>
    %67 = arith.maximumf %65, %66 : vector<16x32xf32>
    %cst_87 = arith.constant dense<0.000000e+00> : vector<8x32xf32>
    %68 = tpu.matmul %40, %13, %cst_87 {dimension_numbers = #tpu.dot_dimension_numbers<[1], [0], [0], [1], [0, 0, 1, 1], [], []>} : vector<8x10xf32>, vector<10x32xf32>, vector<8x32xf32> -> vector<8x32xf32>
    %69 = vector.broadcast %10 : vector<1x32xf32> to vector<8x32xf32>
    %70 = arith.addf %68, %69 : vector<8x32xf32>
    %cst_88 = arith.constant dense<0.000000e+00> : vector<8xf32>
    %71 = vector.multi_reduction <add>, %70, %cst_88 [1] : vector<8x32xf32> to vector<8xf32>
    %72 = vector.shape_cast %71 : vector<8xf32> to vector<8x1xf32>
    %cst_89 = arith.constant 3.200000e+01 : f32
    %73 = vector.broadcast %cst_89 : f32 to vector<8x1xf32>
    %74 = arith.divf %72, %73 : vector<8x1xf32>
    %75 = vector.broadcast %74 : vector<8x1xf32> to vector<8x32xf32>
    %76 = arith.subf %70, %75 : vector<8x32xf32>
    %77 = arith.mulf %76, %76 : vector<8x32xf32>
    %cst_90 = arith.constant dense<0.000000e+00> : vector<8xf32>
    %78 = vector.multi_reduction <add>, %77, %cst_90 [1] : vector<8x32xf32> to vector<8xf32>
    %79 = vector.shape_cast %78 : vector<8xf32> to vector<8x1xf32>
    %cst_91 = arith.constant 3.200000e+01 : f32
    %80 = vector.broadcast %cst_91 : f32 to vector<8x1xf32>
    %81 = arith.divf %79, %80 : vector<8x1xf32>
    %82 = vector.broadcast %74 : vector<8x1xf32> to vector<8x32xf32>
    %83 = arith.subf %70, %82 : vector<8x32xf32>
    %cst_92 = arith.constant 9.99999974E-6 : f32
    %84 = vector.broadcast %cst_92 : f32 to vector<8x1xf32>
    %85 = arith.addf %81, %84 : vector<8x1xf32>
    %86 = math.rsqrt %85 : vector<8x1xf32>
    %87 = vector.broadcast %86 : vector<8x1xf32> to vector<8x32xf32>
    %88 = arith.mulf %83, %87 : vector<8x32xf32>
    %89 = vector.broadcast %12 : vector<1x32xf32> to vector<8x32xf32>
    %90 = arith.mulf %88, %89 : vector<8x32xf32>
    %91 = vector.broadcast %11 : vector<1x32xf32> to vector<8x32xf32>
    %92 = arith.addf %90, %91 : vector<8x32xf32>
    %cst_93 = arith.constant 0.000000e+00 : f32
    %93 = vector.broadcast %cst_93 : f32 to vector<8x32xf32>
    %94 = arith.maximumf %92, %93 : vector<8x32xf32>
    %cst_94 = arith.constant dense<0.000000e+00> : vector<16x132xf32>
    %95 = tpu.matmul %67, %26, %cst_94 {dimension_numbers = #tpu.dot_dimension_numbers<[1], [0], [0], [1], [0, 0, 1, 1], [], []>} : vector<16x32xf32>, vector<32x132xf32>, vector<16x132xf32> -> vector<16x132xf32>
    %cst_95 = arith.constant dense<0.000000e+00> : vector<8x66xf32>
    %96 = tpu.matmul %94, %27, %cst_95 {dimension_numbers = #tpu.dot_dimension_numbers<[1], [0], [0], [1], [0, 0, 1, 1], [], []>} : vector<8x32xf32>, vector<32x66xf32>, vector<8x66xf32> -> vector<8x66xf32>
    %97 = vector.extract_strided_slice %95 {offsets = [0, 0], sizes = [16, 64], strides = [1, 1]} : vector<16x132xf32> to vector<16x64xf32>
    %98 = vector.extract_strided_slice %96 {offsets = [0, 64], sizes = [8, 2], strides = [1, 1]} : vector<8x66xf32> to vector<8x2xf32>
    %cst_96 = arith.constant dense<0.000000e+00> : vector<16x16xf32>
    %99 = tpu.matmul %16, %67, %cst_96 {dimension_numbers = #tpu.dot_dimension_numbers<[1], [1], [0], [0], [0, 0, 1, 0], [], []>} : vector<16x32xf32>, vector<16x32xf32>, vector<16x16xf32> -> vector<16x16xf32>
    %100 = vector.extract_strided_slice %98 {offsets = [0, 0], sizes = [8, 1], strides = [1, 1]} : vector<8x2xf32> to vector<8x1xf32>
    %101 = vector.extract_strided_slice %98 {offsets = [0, 1], sizes = [8, 1], strides = [1, 1]} : vector<8x2xf32> to vector<8x1xf32>
    %102 = tpu.concatenate %100, %101 in 0 : vector<8x1xf32>, vector<8x1xf32> -> vector<16x1xf32>
    %103 = vector.broadcast %102 : vector<16x1xf32> to vector<16x16xf32>
    %104 = arith.addf %99, %103 : vector<16x16xf32>
    %cst_97 = arith.constant 2.000000e-01 : f32
    %105 = vector.broadcast %cst_97 : f32 to vector<16x16xf32>
    %106 = arith.mulf %105, %104 : vector<16x16xf32>
    %107 = arith.maximumf %104, %106 : vector<16x16xf32>
    %108 = arith.addf %107, %3 : vector<16x16xf32>
    %cst_98 = arith.constant dense<0xFF800000> : vector<16xf32>
    %109 = vector.multi_reduction <maximumf>, %108, %cst_98 [1] : vector<16x16xf32> to vector<16xf32>
    %110 = vector.shape_cast %109 : vector<16xf32> to vector<16x1xf32>
    %111 = vector.broadcast %110 : vector<16x1xf32> to vector<16x16xf32>
    %112 = arith.subf %108, %111 : vector<16x16xf32>
    %113 = math.exp %112 : vector<16x16xf32>
    %114 = arith.mulf %113, %0 : vector<16x16xf32>
    %cst_99 = arith.constant dense<0.000000e+00> : vector<16xf32>
    %115 = vector.multi_reduction <add>, %114, %cst_99 [1] : vector<16x16xf32> to vector<16xf32>
    %116 = vector.shape_cast %115 : vector<16xf32> to vector<16x1xf32>
    %cst_100 = arith.constant 1.000000e-16 : f32
    %117 = vector.broadcast %cst_100 : f32 to vector<16x1xf32>
    %118 = arith.maximumf %116, %117 : vector<16x1xf32>
    %119 = tpu.reciprocal %118 {approx = true} : vector<16x1xf32> -> vector<16x1xf32>
    %120 = vector.broadcast %119 : vector<16x1xf32> to vector<16x16xf32>
    %121 = arith.mulf %114, %120 : vector<16x16xf32>
    %cst_101 = arith.constant dense<0.000000e+00> : vector<16x64xf32>
    %122 = tpu.matmul %121, %97, %cst_101 {dimension_numbers = #tpu.dot_dimension_numbers<[1], [0], [0], [1], [0, 0, 1, 1], [], []>} : vector<16x16xf32>, vector<16x64xf32>, vector<16x64xf32> -> vector<16x64xf32>
    %123 = vector.extract_strided_slice %122 {offsets = [0, 0], sizes = [8, 32], strides = [1, 1]} : vector<16x64xf32> to vector<8x32xf32>
    %124 = vector.extract_strided_slice %122 {offsets = [8, 32], sizes = [8, 32], strides = [1, 1]} : vector<16x64xf32> to vector<8x32xf32>
    %125 = tpu.concatenate %123, %124 in 1 : vector<8x32xf32>, vector<8x32xf32> -> vector<8x64xf32>
    %126 = vector.broadcast %19 : vector<1x64xf32> to vector<8x64xf32>
    %127 = arith.addf %125, %126 : vector<8x64xf32>
    %128 = vector.extract_strided_slice %96 {offsets = [0, 0], sizes = [8, 64], strides = [1, 1]} : vector<8x66xf32> to vector<8x64xf32>
    %129 = vector.extract_strided_slice %95 {offsets = [0, 128], sizes = [16, 2], strides = [1, 1]} : vector<16x132xf32> to vector<16x2xf32>
    %cst_102 = arith.constant dense<0.000000e+00> : vector<32x8xf32>
    %130 = tpu.matmul %18, %94, %cst_102 {dimension_numbers = #tpu.dot_dimension_numbers<[1], [1], [0], [0], [0, 0, 1, 0], [], []>} : vector<32x32xf32>, vector<8x32xf32>, vector<32x8xf32> -> vector<32x8xf32>
    %131 = vector.extract_strided_slice %129 {offsets = [0, 0], sizes = [16, 1], strides = [1, 1]} : vector<16x2xf32> to vector<16x1xf32>
    %132 = vector.extract_strided_slice %129 {offsets = [0, 1], sizes = [16, 1], strides = [1, 1]} : vector<16x2xf32> to vector<16x1xf32>
    %133 = tpu.concatenate %131, %132 in 0 : vector<16x1xf32>, vector<16x1xf32> -> vector<32x1xf32>
    %134 = vector.broadcast %133 : vector<32x1xf32> to vector<32x8xf32>
    %135 = arith.addf %130, %134 : vector<32x8xf32>
    %cst_103 = arith.constant 2.000000e-01 : f32
    %136 = vector.broadcast %cst_103 : f32 to vector<32x8xf32>
    %137 = arith.mulf %136, %135 : vector<32x8xf32>
    %138 = arith.maximumf %135, %137 : vector<32x8xf32>
    %139 = arith.addf %138, %5 : vector<32x8xf32>
    %cst_104 = arith.constant dense<0xFF800000> : vector<32xf32>
    %140 = vector.multi_reduction <maximumf>, %139, %cst_104 [1] : vector<32x8xf32> to vector<32xf32>
    %141 = vector.shape_cast %140 : vector<32xf32> to vector<32x1xf32>
    %142 = vector.broadcast %141 : vector<32x1xf32> to vector<32x8xf32>
    %143 = arith.subf %139, %142 : vector<32x8xf32>
    %144 = math.exp %143 : vector<32x8xf32>
    %145 = arith.mulf %144, %2 : vector<32x8xf32>
    %cst_105 = arith.constant dense<0.000000e+00> : vector<32xf32>
    %146 = vector.multi_reduction <add>, %145, %cst_105 [1] : vector<32x8xf32> to vector<32xf32>
    %147 = vector.shape_cast %146 : vector<32xf32> to vector<32x1xf32>
    %cst_106 = arith.constant 1.000000e-16 : f32
    %148 = vector.broadcast %cst_106 : f32 to vector<32x1xf32>
    %149 = arith.maximumf %147, %148 : vector<32x1xf32>
    %150 = tpu.reciprocal %149 {approx = true} : vector<32x1xf32> -> vector<32x1xf32>
    %151 = vector.broadcast %150 : vector<32x1xf32> to vector<32x8xf32>
    %152 = arith.mulf %145, %151 : vector<32x8xf32>
    %cst_107 = arith.constant dense<0.000000e+00> : vector<32x64xf32>
    %153 = tpu.matmul %152, %128, %cst_107 {dimension_numbers = #tpu.dot_dimension_numbers<[1], [0], [0], [1], [0, 0, 1, 1], [], []>} : vector<32x8xf32>, vector<8x64xf32>, vector<32x64xf32> -> vector<32x64xf32>
    %154 = vector.extract_strided_slice %153 {offsets = [0, 0], sizes = [16, 32], strides = [1, 1]} : vector<32x64xf32> to vector<16x32xf32>
    %155 = vector.extract_strided_slice %153 {offsets = [16, 32], sizes = [16, 32], strides = [1, 1]} : vector<32x64xf32> to vector<16x32xf32>
    %156 = tpu.concatenate %154, %155 in 1 : vector<16x32xf32>, vector<16x32xf32> -> vector<16x64xf32>
    %157 = vector.broadcast %21 : vector<1x64xf32> to vector<16x64xf32>
    %158 = arith.addf %156, %157 : vector<16x64xf32>
    %159 = vector.extract_strided_slice %95 {offsets = [0, 64], sizes = [16, 64], strides = [1, 1]} : vector<16x132xf32> to vector<16x64xf32>
    %160 = vector.extract_strided_slice %95 {offsets = [0, 130], sizes = [16, 2], strides = [1, 1]} : vector<16x132xf32> to vector<16x2xf32>
    %cst_108 = arith.constant dense<0.000000e+00> : vector<32x16xf32>
    %161 = tpu.matmul %17, %67, %cst_108 {dimension_numbers = #tpu.dot_dimension_numbers<[1], [1], [0], [0], [0, 0, 1, 0], [], []>} : vector<32x32xf32>, vector<16x32xf32>, vector<32x16xf32> -> vector<32x16xf32>
    %162 = vector.extract_strided_slice %160 {offsets = [0, 0], sizes = [16, 1], strides = [1, 1]} : vector<16x2xf32> to vector<16x1xf32>
    %163 = vector.extract_strided_slice %160 {offsets = [0, 1], sizes = [16, 1], strides = [1, 1]} : vector<16x2xf32> to vector<16x1xf32>
    %164 = tpu.concatenate %162, %163 in 0 : vector<16x1xf32>, vector<16x1xf32> -> vector<32x1xf32>
    %165 = vector.broadcast %164 : vector<32x1xf32> to vector<32x16xf32>
    %166 = arith.addf %161, %165 : vector<32x16xf32>
    %cst_109 = arith.constant 2.000000e-01 : f32
    %167 = vector.broadcast %cst_109 : f32 to vector<32x16xf32>
    %168 = arith.mulf %167, %166 : vector<32x16xf32>
    %169 = arith.maximumf %166, %168 : vector<32x16xf32>
    %170 = arith.addf %169, %4 : vector<32x16xf32>
    %cst_110 = arith.constant dense<0xFF800000> : vector<32xf32>
    %171 = vector.multi_reduction <maximumf>, %170, %cst_110 [1] : vector<32x16xf32> to vector<32xf32>
    %172 = vector.shape_cast %171 : vector<32xf32> to vector<32x1xf32>
    %173 = vector.broadcast %172 : vector<32x1xf32> to vector<32x16xf32>
    %174 = arith.subf %170, %173 : vector<32x16xf32>
    %175 = math.exp %174 : vector<32x16xf32>
    %176 = arith.mulf %175, %1 : vector<32x16xf32>
    %cst_111 = arith.constant dense<0.000000e+00> : vector<32xf32>
    %177 = vector.multi_reduction <add>, %176, %cst_111 [1] : vector<32x16xf32> to vector<32xf32>
    %178 = vector.shape_cast %177 : vector<32xf32> to vector<32x1xf32>
    %cst_112 = arith.constant 1.000000e-16 : f32
    %179 = vector.broadcast %cst_112 : f32 to vector<32x1xf32>
    %180 = arith.maximumf %178, %179 : vector<32x1xf32>
    %181 = tpu.reciprocal %180 {approx = true} : vector<32x1xf32> -> vector<32x1xf32>
    %182 = vector.broadcast %181 : vector<32x1xf32> to vector<32x16xf32>
    %183 = arith.mulf %176, %182 : vector<32x16xf32>
    %cst_113 = arith.constant dense<0.000000e+00> : vector<32x64xf32>
    %184 = tpu.matmul %183, %159, %cst_113 {dimension_numbers = #tpu.dot_dimension_numbers<[1], [0], [0], [1], [0, 0, 1, 1], [], []>} : vector<32x16xf32>, vector<16x64xf32>, vector<32x64xf32> -> vector<32x64xf32>
    %185 = vector.extract_strided_slice %184 {offsets = [0, 0], sizes = [16, 32], strides = [1, 1]} : vector<32x64xf32> to vector<16x32xf32>
    %186 = vector.extract_strided_slice %184 {offsets = [16, 32], sizes = [16, 32], strides = [1, 1]} : vector<32x64xf32> to vector<16x32xf32>
    %187 = tpu.concatenate %185, %186 in 1 : vector<16x32xf32>, vector<16x32xf32> -> vector<16x64xf32>
    %188 = vector.broadcast %20 : vector<1x64xf32> to vector<16x64xf32>
    %189 = arith.addf %187, %188 : vector<16x64xf32>
    %190 = arith.addf %158, %189 : vector<16x64xf32>
    %cst_114 = arith.constant dense<0.000000e+00> : vector<16x32xf32>
    %191 = tpu.matmul %190, %23, %cst_114 {dimension_numbers = #tpu.dot_dimension_numbers<[1], [0], [0], [1], [0, 0, 1, 1], [], []>} : vector<16x64xf32>, vector<64x32xf32>, vector<16x32xf32> -> vector<16x32xf32>
    %192 = vector.broadcast %22 : vector<1x32xf32> to vector<16x32xf32>
    %193 = arith.addf %191, %192 : vector<16x32xf32>
    %cst_115 = arith.constant 0.000000e+00 : f32
    %194 = vector.broadcast %cst_115 : f32 to vector<16x32xf32>
    %195 = arith.maximumf %193, %194 : vector<16x32xf32>
    %cst_116 = arith.constant dense<0.000000e+00> : vector<8x32xf32>
    %196 = tpu.matmul %127, %25, %cst_116 {dimension_numbers = #tpu.dot_dimension_numbers<[1], [0], [0], [1], [0, 0, 1, 1], [], []>} : vector<8x64xf32>, vector<64x32xf32>, vector<8x32xf32> -> vector<8x32xf32>
    %197 = vector.broadcast %24 : vector<1x32xf32> to vector<8x32xf32>
    %198 = arith.addf %196, %197 : vector<8x32xf32>
    %cst_117 = arith.constant 0.000000e+00 : f32
    %199 = vector.broadcast %cst_117 : f32 to vector<8x32xf32>
    %200 = arith.maximumf %198, %199 : vector<8x32xf32>
    %cst_118 = arith.constant dense<0.000000e+00> : vector<16x132xf32>
    %201 = tpu.matmul %195, %34, %cst_118 {dimension_numbers = #tpu.dot_dimension_numbers<[1], [0], [0], [1], [0, 0, 1, 1], [], []>} : vector<16x32xf32>, vector<32x132xf32>, vector<16x132xf32> -> vector<16x132xf32>
    %cst_119 = arith.constant dense<0.000000e+00> : vector<8x66xf32>
    %202 = tpu.matmul %200, %35, %cst_119 {dimension_numbers = #tpu.dot_dimension_numbers<[1], [0], [0], [1], [0, 0, 1, 1], [], []>} : vector<8x32xf32>, vector<32x66xf32>, vector<8x66xf32> -> vector<8x66xf32>
    %203 = vector.extract_strided_slice %202 {offsets = [0, 0], sizes = [8, 64], strides = [1, 1]} : vector<8x66xf32> to vector<8x64xf32>
    %204 = vector.extract_strided_slice %201 {offsets = [0, 128], sizes = [16, 2], strides = [1, 1]} : vector<16x132xf32> to vector<16x2xf32>
    %cst_120 = arith.constant dense<0.000000e+00> : vector<32x8xf32>
    %205 = tpu.matmul %29, %200, %cst_120 {dimension_numbers = #tpu.dot_dimension_numbers<[1], [1], [0], [0], [0, 0, 1, 0], [], []>} : vector<32x32xf32>, vector<8x32xf32>, vector<32x8xf32> -> vector<32x8xf32>
    %206 = vector.extract_strided_slice %204 {offsets = [0, 0], sizes = [16, 1], strides = [1, 1]} : vector<16x2xf32> to vector<16x1xf32>
    %207 = vector.extract_strided_slice %204 {offsets = [0, 1], sizes = [16, 1], strides = [1, 1]} : vector<16x2xf32> to vector<16x1xf32>
    %208 = tpu.concatenate %206, %207 in 0 : vector<16x1xf32>, vector<16x1xf32> -> vector<32x1xf32>
    %209 = vector.broadcast %208 : vector<32x1xf32> to vector<32x8xf32>
    %210 = arith.addf %205, %209 : vector<32x8xf32>
    %cst_121 = arith.constant 2.000000e-01 : f32
    %211 = vector.broadcast %cst_121 : f32 to vector<32x8xf32>
    %212 = arith.mulf %211, %210 : vector<32x8xf32>
    %213 = arith.maximumf %210, %212 : vector<32x8xf32>
    %214 = arith.addf %213, %5 : vector<32x8xf32>
    %cst_122 = arith.constant dense<0xFF800000> : vector<32xf32>
    %215 = vector.multi_reduction <maximumf>, %214, %cst_122 [1] : vector<32x8xf32> to vector<32xf32>
    %216 = vector.shape_cast %215 : vector<32xf32> to vector<32x1xf32>
    %217 = vector.broadcast %216 : vector<32x1xf32> to vector<32x8xf32>
    %218 = arith.subf %214, %217 : vector<32x8xf32>
    %219 = math.exp %218 : vector<32x8xf32>
    %220 = arith.mulf %219, %2 : vector<32x8xf32>
    %cst_123 = arith.constant dense<0.000000e+00> : vector<32xf32>
    %221 = vector.multi_reduction <add>, %220, %cst_123 [1] : vector<32x8xf32> to vector<32xf32>
    %222 = vector.shape_cast %221 : vector<32xf32> to vector<32x1xf32>
    %cst_124 = arith.constant 1.000000e-16 : f32
    %223 = vector.broadcast %cst_124 : f32 to vector<32x1xf32>
    %224 = arith.maximumf %222, %223 : vector<32x1xf32>
    %225 = tpu.reciprocal %224 {approx = true} : vector<32x1xf32> -> vector<32x1xf32>
    %226 = vector.broadcast %225 : vector<32x1xf32> to vector<32x8xf32>
    %227 = arith.mulf %220, %226 : vector<32x8xf32>
    %cst_125 = arith.constant dense<0.000000e+00> : vector<32x64xf32>
    %228 = tpu.matmul %227, %203, %cst_125 {dimension_numbers = #tpu.dot_dimension_numbers<[1], [0], [0], [1], [0, 0, 1, 1], [], []>} : vector<32x8xf32>, vector<8x64xf32>, vector<32x64xf32> -> vector<32x64xf32>
    %229 = vector.extract_strided_slice %228 {offsets = [0, 0], sizes = [16, 32], strides = [1, 1]} : vector<32x64xf32> to vector<16x32xf32>
    %230 = vector.extract_strided_slice %228 {offsets = [16, 32], sizes = [16, 32], strides = [1, 1]} : vector<32x64xf32> to vector<16x32xf32>
    %231 = tpu.concatenate %229, %230 in 1 : vector<16x32xf32>, vector<16x32xf32> -> vector<16x64xf32>
    %232 = vector.broadcast %31 : vector<1x64xf32> to vector<16x64xf32>
    %233 = arith.addf %231, %232 : vector<16x64xf32>
    %234 = vector.extract_strided_slice %201 {offsets = [0, 64], sizes = [16, 64], strides = [1, 1]} : vector<16x132xf32> to vector<16x64xf32>
    %235 = vector.extract_strided_slice %201 {offsets = [0, 130], sizes = [16, 2], strides = [1, 1]} : vector<16x132xf32> to vector<16x2xf32>
    %cst_126 = arith.constant dense<0.000000e+00> : vector<32x16xf32>
    %236 = tpu.matmul %28, %195, %cst_126 {dimension_numbers = #tpu.dot_dimension_numbers<[1], [1], [0], [0], [0, 0, 1, 0], [], []>} : vector<32x32xf32>, vector<16x32xf32>, vector<32x16xf32> -> vector<32x16xf32>
    %237 = vector.extract_strided_slice %235 {offsets = [0, 0], sizes = [16, 1], strides = [1, 1]} : vector<16x2xf32> to vector<16x1xf32>
    %238 = vector.extract_strided_slice %235 {offsets = [0, 1], sizes = [16, 1], strides = [1, 1]} : vector<16x2xf32> to vector<16x1xf32>
    %239 = tpu.concatenate %237, %238 in 0 : vector<16x1xf32>, vector<16x1xf32> -> vector<32x1xf32>
    %240 = vector.broadcast %239 : vector<32x1xf32> to vector<32x16xf32>
    %241 = arith.addf %236, %240 : vector<32x16xf32>
    %cst_127 = arith.constant 2.000000e-01 : f32
    %242 = vector.broadcast %cst_127 : f32 to vector<32x16xf32>
    %243 = arith.mulf %242, %241 : vector<32x16xf32>
    %244 = arith.maximumf %241, %243 : vector<32x16xf32>
    %245 = arith.addf %244, %4 : vector<32x16xf32>
    %cst_128 = arith.constant dense<0xFF800000> : vector<32xf32>
    %246 = vector.multi_reduction <maximumf>, %245, %cst_128 [1] : vector<32x16xf32> to vector<32xf32>
    %247 = vector.shape_cast %246 : vector<32xf32> to vector<32x1xf32>
    %248 = vector.broadcast %247 : vector<32x1xf32> to vector<32x16xf32>
    %249 = arith.subf %245, %248 : vector<32x16xf32>
    %250 = math.exp %249 : vector<32x16xf32>
    %251 = arith.mulf %250, %1 : vector<32x16xf32>
    %cst_129 = arith.constant dense<0.000000e+00> : vector<32xf32>
    %252 = vector.multi_reduction <add>, %251, %cst_129 [1] : vector<32x16xf32> to vector<32xf32>
    %253 = vector.shape_cast %252 : vector<32xf32> to vector<32x1xf32>
    %cst_130 = arith.constant 1.000000e-16 : f32
    %254 = vector.broadcast %cst_130 : f32 to vector<32x1xf32>
    %255 = arith.maximumf %253, %254 : vector<32x1xf32>
    %256 = tpu.reciprocal %255 {approx = true} : vector<32x1xf32> -> vector<32x1xf32>
    %257 = vector.broadcast %256 : vector<32x1xf32> to vector<32x16xf32>
    %258 = arith.mulf %251, %257 : vector<32x16xf32>
    %cst_131 = arith.constant dense<0.000000e+00> : vector<32x64xf32>
    %259 = tpu.matmul %258, %234, %cst_131 {dimension_numbers = #tpu.dot_dimension_numbers<[1], [0], [0], [1], [0, 0, 1, 1], [], []>} : vector<32x16xf32>, vector<16x64xf32>, vector<32x64xf32> -> vector<32x64xf32>
    %260 = vector.extract_strided_slice %259 {offsets = [0, 0], sizes = [16, 32], strides = [1, 1]} : vector<32x64xf32> to vector<16x32xf32>
    %261 = vector.extract_strided_slice %259 {offsets = [16, 32], sizes = [16, 32], strides = [1, 1]} : vector<32x64xf32> to vector<16x32xf32>
    %262 = tpu.concatenate %260, %261 in 1 : vector<16x32xf32>, vector<16x32xf32> -> vector<16x64xf32>
    %263 = vector.broadcast %30 : vector<1x64xf32> to vector<16x64xf32>
    %264 = arith.addf %262, %263 : vector<16x64xf32>
    %265 = arith.addf %233, %264 : vector<16x64xf32>
    %cst_132 = arith.constant dense<0.000000e+00> : vector<16x32xf32>
    %266 = tpu.matmul %265, %33, %cst_132 {dimension_numbers = #tpu.dot_dimension_numbers<[1], [0], [0], [1], [0, 0, 1, 1], [], []>} : vector<16x64xf32>, vector<64x32xf32>, vector<16x32xf32> -> vector<16x32xf32>
    %267 = vector.broadcast %32 : vector<1x32xf32> to vector<16x32xf32>
    %268 = arith.addf %266, %267 : vector<16x32xf32>
    %cst_133 = arith.constant 0.000000e+00 : f32
    %269 = vector.broadcast %cst_133 : f32 to vector<16x32xf32>
    %270 = arith.maximumf %268, %269 : vector<16x32xf32>
    %cst_134 = arith.constant dense<0.000000e+00> : vector<16x8xf32>
    %271 = tpu.matmul %270, %15, %cst_134 {dimension_numbers = #tpu.dot_dimension_numbers<[1], [0], [0], [1], [0, 0, 1, 1], [], []>} : vector<16x32xf32>, vector<32x8xf32>, vector<16x8xf32> -> vector<16x8xf32>
    %272 = vector.broadcast %14 : vector<1x8xf32> to vector<16x8xf32>
    %273 = arith.addf %271, %272 : vector<16x8xf32>
    %cst_135 = arith.constant dense<0.000000e+00> : vector<8x8xf32>
    %274 = tpu.matmul %38, %37, %cst_135 {dimension_numbers = #tpu.dot_dimension_numbers<[1], [0], [0], [1], [0, 0, 1, 1], [], []>} : vector<8x32xf32>, vector<32x8xf32>, vector<8x8xf32> -> vector<8x8xf32>
    %275 = vector.broadcast %36 : vector<1x8xf32> to vector<8x8xf32>
    %276 = arith.addf %274, %275 : vector<8x8xf32>
    %cst_136 = arith.constant dense<0.000000e+00> : vector<16x8xf32>
    %277 = tpu.matmul %273, %276, %cst_136 {dimension_numbers = #tpu.dot_dimension_numbers<[1], [1], [0], [0], [0, 0, 1, 0], [], []>} : vector<16x8xf32>, vector<8x8xf32>, vector<16x8xf32> -> vector<16x8xf32>
    %278 = tpu.concatenate %273, %277 in 1 : vector<16x8xf32>, vector<16x8xf32> -> vector<16x16xf32>
    %c0_137 = arith.constant 0 : index
    %c0_138 = arith.constant 0 : index
    %279 = vector.load %arg45[%c0_137, %c0_138] : memref<16x16xf32, #tpu.memory_space<vmem>>, vector<16x16xf32>
    tpu.vector_store %arg45[%c0_137, %c0_138], %278 {strides = array<i32>} : memref<16x16xf32, #tpu.memory_space<vmem>>, vector<16x16xf32>,
    %c0_139 = arith.constant 0 : index
    %c0_140 = arith.constant 0 : index
    %280 = vector.load %arg46[%c0_139, %c0_140] : memref<8x8xf32, #tpu.memory_space<vmem>>, vector<8x8xf32>
    tpu.vector_store %arg46[%c0_139, %c0_140], %276 {strides = array<i32>} : memref<8x8xf32, #tpu.memory_space<vmem>>, vector<8x8xf32>,
    return
  }
}

</mosaic_0001>

<llo_original>
// kernel: hetero_gnn_forward.1
$region0: #{hetero_gnn_forward.1}
  #allocation0 [shape = 'u32[]', space=smem, size = 0x4, offset = 0x4, fixed_abs, tag = 'smem constant byte address 0x4 - core index']
  #allocation1 [shape = 'u32[72,128]{1,0:T(1,128)}', space=vmem, size = 0x9000, scoped, tag = 'internal scratch']
  %s0 = inlined_call_operand.smem [shape: u32[47], index: -1, kind: input, shape index: {}]
  %s1 = sld [smem:[%s0]]
  %s2 = scalar_lea.smem %s0, 1
  %s3 = sld [smem:[%s2]]
  %s4 = scalar_lea.smem %s0, 2
  %s5 = sld [smem:[%s4]]
  %s6 = scalar_lea.smem %s0, 3
  %s7 = sld [smem:[%s6]]
  %s8 = scalar_lea.smem %s0, 4
  %s9 = sld [smem:[%s8]]
  %s10 = scalar_lea.smem %s0, 5
  %s11 = sld [smem:[%s10]]
  %s12 = scalar_lea.smem %s0, 6
  %s13 = sld [smem:[%s12]]
  %s14 = scalar_lea.smem %s0, 7
  %s15 = sld [smem:[%s14]]
  %s16 = scalar_lea.smem %s0, 8
  %s17 = sld [smem:[%s16]]
  %s18 = scalar_lea.smem %s0, 9
  %s19 = sld [smem:[%s18]]
  %s20 = scalar_lea.smem %s0, 10
  %s21 = sld [smem:[%s20]]
  %s22 = scalar_lea.smem %s0, 11
  %s23 = sld [smem:[%s22]]
  %s24 = scalar_lea.smem %s0, 12
  %s25 = sld [smem:[%s24]]
  %s26 = scalar_lea.smem %s0, 13
  %s27 = sld [smem:[%s26]]
  %s28 = scalar_lea.smem %s0, 14
  %s29 = sld [smem:[%s28]]
  %s30 = scalar_lea.smem %s0, 15
  %s31 = sld [smem:[%s30]]
  %s32 = scalar_lea.smem %s0, 16
  %s33 = sld [smem:[%s32]]
  %s34 = scalar_lea.smem %s0, 17
  %s35 = sld [smem:[%s34]]
  %s36 = scalar_lea.smem %s0, 18
  %s37 = sld [smem:[%s36]]
  %s38 = scalar_lea.smem %s0, 19
  %s39 = sld [smem:[%s38]]
  %s40 = scalar_lea.smem %s0, 20
  %s41 = sld [smem:[%s40]]
  %s42 = scalar_lea.smem %s0, 21
  %s43 = sld [smem:[%s42]]
  %s44 = scalar_lea.smem %s0, 22
  %s45 = sld [smem:[%s44]]
  %s46 = scalar_lea.smem %s0, 23
  %s47 = sld [smem:[%s46]]
  %s48 = scalar_lea.smem %s0, 24
  %s49 = sld [smem:[%s48]]
  %s50 = scalar_lea.smem %s0, 25
  %s51 = sld [smem:[%s50]]
  %s52 = scalar_lea.smem %s0, 26
  %s53 = sld [smem:[%s52]]
  %s54 = scalar_lea.smem %s0, 27
  %s55 = sld [smem:[%s54]]
  %s56 = scalar_lea.smem %s0, 28
  %s57 = sld [smem:[%s56]]
  %s58 = scalar_lea.smem %s0, 29
  %s59 = sld [smem:[%s58]]
  %s60 = scalar_lea.smem %s0, 30
  %s61 = sld [smem:[%s60]]
  %s62 = scalar_lea.smem %s0, 31
  %s63 = sld [smem:[%s62]]
  %s64 = scalar_lea.smem %s0, 32
  %s65 = sld [smem:[%s64]]
  %s66 = scalar_lea.smem %s0, 33
  %s67 = sld [smem:[%s66]]
  %s68 = scalar_lea.smem %s0, 34
  %s69 = sld [smem:[%s68]]
  %s70 = scalar_lea.smem %s0, 35
  %s71 = sld [smem:[%s70]]
  %s72 = scalar_lea.smem %s0, 36
  %s73 = sld [smem:[%s72]]
  %s74 = scalar_lea.smem %s0, 37
  %s75 = sld [smem:[%s74]]
  %s76 = scalar_lea.smem %s0, 38
  %s77 = sld [smem:[%s76]]
  %s78 = scalar_lea.smem %s0, 39
  %s79 = sld [smem:[%s78]]
  %s80 = scalar_lea.smem %s0, 40
  %s81 = sld [smem:[%s80]]
  %s82 = scalar_lea.smem %s0, 41
  %s83 = sld [smem:[%s82]]
  %s84 = scalar_lea.smem %s0, 42
  %s85 = sld [smem:[%s84]]
  %s86 = scalar_lea.smem %s0, 43
  %s87 = sld [smem:[%s86]]
  %s88 = scalar_lea.smem %s0, 44
  %s89 = sld [smem:[%s88]]
  %s90 = scalar_lea.smem %s0, 45
  %s91 = sld [smem:[%s90]]
  %s92 = scalar_lea.smem %s0, 46
  %s93 = sld [smem:[%s92]]
  %94 = xla_tuple %s91, %s93
  %s95 = sld [smem:[#allocation0]]
  $region198: #{hetero_gnn_forward.1} parent=0
    _
  %s97 = ssub.s32 1, %s95
  %s98 = scalar_select 0, %s97, %s95
  // Predicated region
  $region2: #{hetero_gnn_forward.1} parent=0 // pred_check
    _
  $region3: #{hetero_gnn_forward.1} parent=0 // pred_check_branch
    %100 = sbr.rel (0) target = $region5
  $region4: #{hetero_gnn_forward.1} parent=0 // pred_region
    _
  $region5: #{hetero_gnn_forward.1} parent=0 // pred_fallthru
    _
  // Predicated region
  $region6: #{hetero_gnn_forward.1} parent=0 // pred_check
    _
  $region7: #{hetero_gnn_forward.1} parent=0 // pred_check_branch
    %102 = sbr.rel (0) target = $region9
  $region8: #{hetero_gnn_forward.1} parent=0 // pred_region
    _
  $region9: #{hetero_gnn_forward.1} parent=0 // pred_fallthru
    _
  // Predicated region
  $region10: #{hetero_gnn_forward.1} parent=0 // pred_check
    _
  $region11: #{hetero_gnn_forward.1} parent=0 // pred_check_branch
    %104 = sbr.rel (0) target = $region13
  $region12: #{hetero_gnn_forward.1} parent=0 // pred_region
    _
  $region13: #{hetero_gnn_forward.1} parent=0 // pred_fallthru
    _
  // Predicated region
  $region14: #{hetero_gnn_forward.1} parent=0 // pred_check
    _
  $region15: #{hetero_gnn_forward.1} parent=0 // pred_check_branch
    %106 = sbr.rel (0) target = $region17
  $region16: #{hetero_gnn_forward.1} parent=0 // pred_region
    _
  $region17: #{hetero_gnn_forward.1} parent=0 // pred_fallthru
    _
  // Predicated region
  $region18: #{hetero_gnn_forward.1} parent=0 // pred_check
    _
  $region19: #{hetero_gnn_forward.1} parent=0 // pred_check_branch
    %108 = sbr.rel (0) target = $region21
  $region20: #{hetero_gnn_forward.1} parent=0 // pred_region
    _
  $region21: #{hetero_gnn_forward.1} parent=0 // pred_fallthru
    _
  // Predicated region
  $region22: #{hetero_gnn_forward.1} parent=0 // pred_check
    _
  $region23: #{hetero_gnn_forward.1} parent=0 // pred_check_branch
    %110 = sbr.rel (0) target = $region25
  $region24: #{hetero_gnn_forward.1} parent=0 // pred_region
    _
  $region25: #{hetero_gnn_forward.1} parent=0 // pred_fallthru
    _
  // Predicated region
  $region26: #{hetero_gnn_forward.1} parent=0 // pred_check
    _
  $region27: #{hetero_gnn_forward.1} parent=0 // pred_check_branch
    %112 = sbr.rel (0) target = $region29
  $region28: #{hetero_gnn_forward.1} parent=0 // pred_region
    _
  $region29: #{hetero_gnn_forward.1} parent=0 // pred_fallthru
    _
  // Predicated region
  $region30: #{hetero_gnn_forward.1} parent=0 // pred_check
    _
  $region31: #{hetero_gnn_forward.1} parent=0 // pred_check_branch
    %114 = sbr.rel (0) target = $region33
  $region32: #{hetero_gnn_forward.1} parent=0 // pred_region
    _
  $region33: #{hetero_gnn_forward.1} parent=0 // pred_fallthru
    _
  // Predicated region
  $region34: #{hetero_gnn_forward.1} parent=0 // pred_check
    _
  $region35: #{hetero_gnn_forward.1} parent=0 // pred_check_branch
    %116 = sbr.rel (0) target = $region37
  $region36: #{hetero_gnn_forward.1} parent=0 // pred_region
    _
  $region37: #{hetero_gnn_forward.1} parent=0 // pred_fallthru
    _
  // Predicated region
  $region38: #{hetero_gnn_forward.1} parent=0 // pred_check
    _
  $region39: #{hetero_gnn_forward.1} parent=0 // pred_check_branch
    %118 = sbr.rel (0) target = $region41
  $region40: #{hetero_gnn_forward.1} parent=0 // pred_region
    _
  $region41: #{hetero_gnn_forward.1} parent=0 // pred_fallthru
    _
  // Predicated region
  $region42: #{hetero_gnn_forward.1} parent=0 // pred_check
    _
  $region43: #{hetero_gnn_forward.1} parent=0 // pred_check_branch
    %120 = sbr.rel (0) target = $region45
  $region44: #{hetero_gnn_forward.1} parent=0 // pred_region
    _
  $region45: #{hetero_gnn_forward.1} parent=0 // pred_fallthru
    _
  // Predicated region
  $region46: #{hetero_gnn_forward.1} parent=0 // pred_check
    _
  $region47: #{hetero_gnn_forward.1} parent=0 // pred_check_branch
    %122 = sbr.rel (0) target = $region49
  $region48: #{hetero_gnn_forward.1} parent=0 // pred_region
    _
  $region49: #{hetero_gnn_forward.1} parent=0 // pred_fallthru
    _
  // Predicated region
  $region50: #{hetero_gnn_forward.1} parent=0 // pred_check
    _
  $region51: #{hetero_gnn_forward.1} parent=0 // pred_check_branch
    %124 = sbr.rel (0) target = $region53
  $region52: #{hetero_gnn_forward.1} parent=0 // pred_region
    _
  $region53: #{hetero_gnn_forward.1} parent=0 // pred_fallthru
    _
  // Predicated region
  $region54: #{hetero_gnn_forward.1} parent=0 // pred_check
    _
  $region55: #{hetero_gnn_forward.1} parent=0 // pred_check_branch
    %126 = sbr.rel (0) target = $region57
  $region56: #{hetero_gnn_forward.1} parent=0 // pred_region
    _
  $region57: #{hetero_gnn_forward.1} parent=0 // pred_fallthru
    _
  // Predicated region
  $region58: #{hetero_gnn_forward.1} parent=0 // pred_check
    _
  $region59: #{hetero_gnn_forward.1} parent=0 // pred_check_branch
    %128 = sbr.rel (0) target = $region61
  $region60: #{hetero_gnn_forward.1} parent=0 // pred_region
    _
  $region61: #{hetero_gnn_forward.1} parent=0 // pred_fallthru
    _
  // Predicated region
  $region62: #{hetero_gnn_forward.1} parent=0 // pred_check
    _
  $region63: #{hetero_gnn_forward.1} parent=0 // pred_check_branch
    %130 = sbr.rel (0) target = $region65
  $region64: #{hetero_gnn_forward.1} parent=0 // pred_region
    _
  $region65: #{hetero_gnn_forward.1} parent=0 // pred_fallthru
    _
  // Predicated region
  $region66: #{hetero_gnn_forward.1} parent=0 // pred_check
    _
  $region67: #{hetero_gnn_forward.1} parent=0 // pred_check_branch
    %132 = sbr.rel (0) target = $region69
  $region68: #{hetero_gnn_forward.1} parent=0 // pred_region
    _
  $region69: #{hetero_gnn_forward.1} parent=0 // pred_fallthru
    _
  // Predicated region
  $region70: #{hetero_gnn_forward.1} parent=0 // pred_check
    _
  $region71: #{hetero_gnn_forward.1} parent=0 // pred_check_branch
    %134 = sbr.rel (0) target = $region73
  $region72: #{hetero_gnn_forward.1} parent=0 // pred_region
    _
  $region73: #{hetero_gnn_forward.1} parent=0 // pred_fallthru
    _
  // Predicated region
  $region74: #{hetero_gnn_forward.1} parent=0 // pred_check
    _
  $region75: #{hetero_gnn_forward.1} parent=0 // pred_check_branch
    %136 = sbr.rel (0) target = $region77
  $region76: #{hetero_gnn_forward.1} parent=0 // pred_region
    _
  $region77: #{hetero_gnn_forward.1} parent=0 // pred_fallthru
    _
  // Predicated region
  $region78: #{hetero_gnn_forward.1} parent=0 // pred_check
    _
  $region79: #{hetero_gnn_forward.1} parent=0 // pred_check_branch
    %138 = sbr.rel (0) target = $region81
  $region80: #{hetero_gnn_forward.1} parent=0 // pred_region
    _
  $region81: #{hetero_gnn_forward.1} parent=0 // pred_fallthru
    _
  // Predicated region
  $region82: #{hetero_gnn_forward.1} parent=0 // pred_check
    _
  $region83: #{hetero_gnn_forward.1} parent=0 // pred_check_branch
    %140 = sbr.rel (0) target = $region85
  $region84: #{hetero_gnn_forward.1} parent=0 // pred_region
    _
  $region85: #{hetero_gnn_forward.1} parent=0 // pred_fallthru
    _
  // Predicated region
  $region86: #{hetero_gnn_forward.1} parent=0 // pred_check
    _
  $region87: #{hetero_gnn_forward.1} parent=0 // pred_check_branch
    %142 = sbr.rel (0) target = $region89
  $region88: #{hetero_gnn_forward.1} parent=0 // pred_region
    _
  $region89: #{hetero_gnn_forward.1} parent=0 // pred_fallthru
    _
  // Predicated region
  $region90: #{hetero_gnn_forward.1} parent=0 // pred_check
    _
  $region91: #{hetero_gnn_forward.1} parent=0 // pred_check_branch
    %144 = sbr.rel (0) target = $region93
  $region92: #{hetero_gnn_forward.1} parent=0 // pred_region
    _
  $region93: #{hetero_gnn_forward.1} parent=0 // pred_fallthru
    _
  // Predicated region
  $region94: #{hetero_gnn_forward.1} parent=0 // pred_check
    _
  $region95: #{hetero_gnn_forward.1} parent=0 // pred_check_branch
    %146 = sbr.rel (0) target = $region97
  $region96: #{hetero_gnn_forward.1} parent=0 // pred_region
    _
  $region97: #{hetero_gnn_forward.1} parent=0 // pred_fallthru
    _
  // Predicated region
  $region98: #{hetero_gnn_forward.1} parent=0 // pred_check
    _
  $region99: #{hetero_gnn_forward.1} parent=0 // pred_check_branch
    %148 = sbr.rel (0) target = $region101
  $region100: #{hetero_gnn_forward.1} parent=0 // pred_region
    _
  $region101: #{hetero_gnn_forward.1} parent=0 // pred_fallthru
    _
  // Predicated region
  $region102: #{hetero_gnn_forward.1} parent=0 // pred_check
    _
  $region103: #{hetero_gnn_forward.1} parent=0 // pred_check_branch
    %150 = sbr.rel (0) target = $region105
  $region104: #{hetero_gnn_forward.1} parent=0 // pred_region
    _
  $region105: #{hetero_gnn_forward.1} parent=0 // pred_fallthru
    _
  // Predicated region
  $region106: #{hetero_gnn_forward.1} parent=0 // pred_check
    _
  $region107: #{hetero_gnn_forward.1} parent=0 // pred_check_branch
    %152 = sbr.rel (0) target = $region109
  $region108: #{hetero_gnn_forward.1} parent=0 // pred_region
    _
  $region109: #{hetero_gnn_forward.1} parent=0 // pred_fallthru
    _
  // Predicated region
  $region110: #{hetero_gnn_forward.1} parent=0 // pred_check
    _
  $region111: #{hetero_gnn_forward.1} parent=0 // pred_check_branch
    %154 = sbr.rel (0) target = $region113
  $region112: #{hetero_gnn_forward.1} parent=0 // pred_region
    _
  $region113: #{hetero_gnn_forward.1} parent=0 // pred_fallthru
    _
  // Predicated region
  $region114: #{hetero_gnn_forward.1} parent=0 // pred_check
    _
  $region115: #{hetero_gnn_forward.1} parent=0 // pred_check_branch
    %156 = sbr.rel (0) target = $region117
  $region116: #{hetero_gnn_forward.1} parent=0 // pred_region
    _
  $region117: #{hetero_gnn_forward.1} parent=0 // pred_fallthru
    _
  // Predicated region
  $region118: #{hetero_gnn_forward.1} parent=0 // pred_check
    _
  $region119: #{hetero_gnn_forward.1} parent=0 // pred_check_branch
    %158 = sbr.rel (0) target = $region121
  $region120: #{hetero_gnn_forward.1} parent=0 // pred_region
    _
  $region121: #{hetero_gnn_forward.1} parent=0 // pred_fallthru
    _
  // Predicated region
  $region122: #{hetero_gnn_forward.1} parent=0 // pred_check
    _
  $region123: #{hetero_gnn_forward.1} parent=0 // pred_check_branch
    %160 = sbr.rel (0) target = $region125
  $region124: #{hetero_gnn_forward.1} parent=0 // pred_region
    _
  $region125: #{hetero_gnn_forward.1} parent=0 // pred_fallthru
    _
  // Predicated region
  $region126: #{hetero_gnn_forward.1} parent=0 // pred_check
    _
  $region127: #{hetero_gnn_forward.1} parent=0 // pred_check_branch
    %162 = sbr.rel (0) target = $region129
  $region128: #{hetero_gnn_forward.1} parent=0 // pred_region
    _
  $region129: #{hetero_gnn_forward.1} parent=0 // pred_fallthru
    _
  // Predicated region
  $region130: #{hetero_gnn_forward.1} parent=0 // pred_check
    _
  $region131: #{hetero_gnn_forward.1} parent=0 // pred_check_branch
    %164 = sbr.rel (0) target = $region133
  $region132: #{hetero_gnn_forward.1} parent=0 // pred_region
    _
  $region133: #{hetero_gnn_forward.1} parent=0 // pred_fallthru
    _
  // Predicated region
  $region134: #{hetero_gnn_forward.1} parent=0 // pred_check
    _
  $region135: #{hetero_gnn_forward.1} parent=0 // pred_check_branch
    %166 = sbr.rel (0) target = $region137
  $region136: #{hetero_gnn_forward.1} parent=0 // pred_region
    _
  $region137: #{hetero_gnn_forward.1} parent=0 // pred_fallthru
    _
  // Predicated region
  $region138: #{hetero_gnn_forward.1} parent=0 // pred_check
    _
  $region139: #{hetero_gnn_forward.1} parent=0 // pred_check_branch
    %168 = sbr.rel (0) target = $region141
  $region140: #{hetero_gnn_forward.1} parent=0 // pred_region
    _
  $region141: #{hetero_gnn_forward.1} parent=0 // pred_fallthru
    _
  // Predicated region
  $region142: #{hetero_gnn_forward.1} parent=0 // pred_check
    _
  $region143: #{hetero_gnn_forward.1} parent=0 // pred_check_branch
    %170 = sbr.rel (0) target = $region145
  $region144: #{hetero_gnn_forward.1} parent=0 // pred_region
    _
  $region145: #{hetero_gnn_forward.1} parent=0 // pred_fallthru
    _
  // Predicated region
  $region146: #{hetero_gnn_forward.1} parent=0 // pred_check
    _
  $region147: #{hetero_gnn_forward.1} parent=0 // pred_check_branch
    %172 = sbr.rel (0) target = $region149
  $region148: #{hetero_gnn_forward.1} parent=0 // pred_region
    _
  $region149: #{hetero_gnn_forward.1} parent=0 // pred_fallthru
    _
  // Predicated region
  $region150: #{hetero_gnn_forward.1} parent=0 // pred_check
    _
  $region151: #{hetero_gnn_forward.1} parent=0 // pred_check_branch
    %174 = sbr.rel (0) target = $region153
  $region152: #{hetero_gnn_forward.1} parent=0 // pred_region
    _
  $region153: #{hetero_gnn_forward.1} parent=0 // pred_fallthru
    _
  // Predicated region
  $region154: #{hetero_gnn_forward.1} parent=0 // pred_check
    _
  $region155: #{hetero_gnn_forward.1} parent=0 // pred_check_branch
    %176 = sbr.rel (0) target = $region157
  $region156: #{hetero_gnn_forward.1} parent=0 // pred_region
    _
  $region157: #{hetero_gnn_forward.1} parent=0 // pred_fallthru
    _
  // Predicated region
  $region158: #{hetero_gnn_forward.1} parent=0 // pred_check
    _
  $region159: #{hetero_gnn_forward.1} parent=0 // pred_check_branch
    %178 = sbr.rel (0) target = $region161
  $region160: #{hetero_gnn_forward.1} parent=0 // pred_region
    _
  $region161: #{hetero_gnn_forward.1} parent=0 // pred_fallthru
    _
  // Predicated region
  $region162: #{hetero_gnn_forward.1} parent=0 // pred_check
    _
  $region163: #{hetero_gnn_forward.1} parent=0 // pred_check_branch
    %180 = sbr.rel (0) target = $region165
  $region164: #{hetero_gnn_forward.1} parent=0 // pred_region
    _
  $region165: #{hetero_gnn_forward.1} parent=0 // pred_fallthru
    _
  // Predicated region
  $region166: #{hetero_gnn_forward.1} parent=0 // pred_check
    _
  $region167: #{hetero_gnn_forward.1} parent=0 // pred_check_branch
    %182 = sbr.rel (0) target = $region169
  $region168: #{hetero_gnn_forward.1} parent=0 // pred_region
    _
  $region169: #{hetero_gnn_forward.1} parent=0 // pred_fallthru
    _
  // Predicated region
  $region170: #{hetero_gnn_forward.1} parent=0 // pred_check
    _
  $region171: #{hetero_gnn_forward.1} parent=0 // pred_check_branch
    %184 = sbr.rel (0) target = $region173
  $region172: #{hetero_gnn_forward.1} parent=0 // pred_region
    _
  $region173: #{hetero_gnn_forward.1} parent=0 // pred_fallthru
    _
  // Predicated region
  $region174: #{hetero_gnn_forward.1} parent=0 // pred_check
    _
  $region175: #{hetero_gnn_forward.1} parent=0 // pred_check_branch
    %186 = sbr.rel (0) target = $region177
  $region176: #{hetero_gnn_forward.1} parent=0 // pred_region
    _
  $region177: #{hetero_gnn_forward.1} parent=0 // pred_fallthru
    _
  // Predicated region
  $region178: #{hetero_gnn_forward.1} parent=0 // pred_check
    _
  $region179: #{hetero_gnn_forward.1} parent=0 // pred_check_branch
    %188 = sbr.rel (0) target = $region181
  $region180: #{hetero_gnn_forward.1} parent=0 // pred_region
    _
  $region181: #{hetero_gnn_forward.1} parent=0 // pred_fallthru
    _
  %v189 = vld [vmem:[%s1] sm:$0xff]
  %v190 = vld [vmem:[%s1 + $0x8] sm:$0xff]
  %v191 = vld [vmem:[%s3] sm:$0xff]
  %v192 = vld [vmem:[%s3 + $0x8] sm:$0xff]
  %v193 = vld [vmem:[%s3 + $0x10] sm:$0xff]
  %v194 = vld [vmem:[%s3 + $0x18] sm:$0xff]
  %v195 = vld [vmem:[%s5] sm:$0xff]
  %v196 = vld [vmem:[%s5 + $0x8] sm:$0xff]
  %v197 = vld [vmem:[%s5 + $0x10] sm:$0xff]
  %v198 = vld [vmem:[%s5 + $0x18] sm:$0xff]
  %v199 = vld [vmem:[%s7] sm:$0xff]
  %v200 = vld [vmem:[%s7 + $0x8] sm:$0xff]
  %v201 = vld [vmem:[%s9] sm:$0xff]
  %v202 = vld [vmem:[%s9 + $0x8] sm:$0xff]
  %v203 = vld [vmem:[%s9 + $0x10] sm:$0xff]
  %v204 = vld [vmem:[%s9 + $0x18] sm:$0xff]
  %v205 = vld [vmem:[%s11] sm:$0xff]
  %v206 = vld [vmem:[%s11 + $0x8] sm:$0xff]
  %v207 = vld [vmem:[%s11 + $0x10] sm:$0xff]
  %v208 = vld [vmem:[%s11 + $0x18] sm:$0xff]
  %v209 = vld [vmem:[%s13] sm:$0x1]
  %v210 = vld [vmem:[%s15] sm:$0x1]
  %v211 = vld [vmem:[%s17] sm:$0x1]
  %v212 = vld [vmem:[%s19] sm:$0xff]
  %v213 = vld [vmem:[%s19 + $0x8] sm:$0xf]
  %v214 = vld [vmem:[%s21] sm:$0x1]
  %v215 = vld [vmem:[%s23] sm:$0x1]
  %v216 = vld [vmem:[%s25] sm:$0x1]
  %v217 = vld [vmem:[%s27] sm:$0xff]
  %v218 = vld [vmem:[%s27 + $0x8] sm:$0x3]
  %v219 = vld [vmem:[%s29] sm:$0x1]
  %v220 = vld [vmem:[%s31] sm:$0xff]
  %v221 = vld [vmem:[%s31 + $0x8] sm:$0xff]
  %v222 = vld [vmem:[%s31 + $0x10] sm:$0xff]
  %v223 = vld [vmem:[%s31 + $0x18] sm:$0xff]
  %v224 = vld [vmem:[%s33] sm:$0xff]
  %v225 = vld [vmem:[%s33 + $0x8] sm:$0xff]
  %v226 = vld [vmem:[%s35] sm:$0xff]
  %v227 = vld [vmem:[%s35 + $0x8] sm:$0xff]
  %v228 = vld [vmem:[%s35 + $0x10] sm:$0xff]
  %v229 = vld [vmem:[%s35 + $0x18] sm:$0xff]
  %v230 = vld [vmem:[%s37] sm:$0xff]
  %v231 = vld [vmem:[%s37 + $0x8] sm:$0xff]
  %v232 = vld [vmem:[%s37 + $0x10] sm:$0xff]
  %v233 = vld [vmem:[%s37 + $0x18] sm:$0xff]
  %v234 = vld [vmem:[%s39] sm:$0x1]
  %v235 = vld [vmem:[%s41] sm:$0x1]
  %v236 = vld [vmem:[%s43] sm:$0x1]
  %v237 = vld [vmem:[%s45] sm:$0x1]
  %v238 = vld [vmem:[%s47] sm:$0xff]
  %v239 = vld [vmem:[%s47 + $0x8] sm:$0xff]
  %v240 = vld [vmem:[%s47 + $0x10] sm:$0xff]
  %v241 = vld [vmem:[%s47 + $0x18] sm:$0xff]
  %v242 = vld [vmem:[%s47 + $0x20] sm:$0xff]
  %v243 = vld [vmem:[%s47 + $0x28] sm:$0xff]
  %v244 = vld [vmem:[%s47 + $0x30] sm:$0xff]
  %v245 = vld [vmem:[%s47 + $0x38] sm:$0xff]
  %v246 = vld [vmem:[%s49] sm:$0x1]
  %v247 = vld [vmem:[%s51] sm:$0xff]
  %v248 = vld [vmem:[%s51 + $0x8] sm:$0xff]
  %v249 = vld [vmem:[%s51 + $0x10] sm:$0xff]
  %v250 = vld [vmem:[%s51 + $0x18] sm:$0xff]
  %v251 = vld [vmem:[%s51 + $0x20] sm:$0xff]
  %v252 = vld [vmem:[%s51 + $0x28] sm:$0xff]
  %v253 = vld [vmem:[%s51 + $0x30] sm:$0xff]
  %v254 = vld [vmem:[%s51 + $0x38] sm:$0xff]
  %v255 = vld [vmem:[%s53] sm:$0xff]
  %v256 = vld [vmem:[%s53 + $0x8] sm:$0xff]
  %v257 = vld [vmem:[%s53 + $0x10] sm:$0xff]
  %v258 = vld [vmem:[%s53 + $0x18] sm:$0xff]
  %v259 = vld [vmem:[%s53 + $0x20] sm:$0xff]
  %v260 = vld [vmem:[%s53 + $0x28] sm:$0xff]
  %v261 = vld [vmem:[%s53 + $0x30] sm:$0xff]
  %v262 = vld [vmem:[%s53 + $0x38] sm:$0xff]
  %v263 = vld [vmem:[%s55] sm:$0xff]
  %v264 = vld [vmem:[%s55 + $0x8] sm:$0xff]
  %v265 = vld [vmem:[%s55 + $0x10] sm:$0xff]
  %v266 = vld [vmem:[%s55 + $0x18] sm:$0xff]
  %v267 = vld [vmem:[%s59] sm:$0xff]
  %v268 = vld [vmem:[%s59 + $0x8] sm:$0xff]
  %v269 = vld [vmem:[%s59 + $0x10] sm:$0xff]
  %v270 = vld [vmem:[%s59 + $0x18] sm:$0xff]
  %v271 = vld [vmem:[%s61] sm:$0xff]
  %v272 = vld [vmem:[%s61 + $0x8] sm:$0xff]
  %v273 = vld [vmem:[%s61 + $0x10] sm:$0xff]
  %v274 = vld [vmem:[%s61 + $0x18] sm:$0xff]
  %v275 = vld [vmem:[%s65] sm:$0x1]
  %v276 = vld [vmem:[%s67] sm:$0x1]
  %v277 = vld [vmem:[%s69] sm:$0x1]
  %v278 = vld [vmem:[%s71] sm:$0xff]
  %v279 = vld [vmem:[%s71 + $0x8] sm:$0xff]
  %v280 = vld [vmem:[%s71 + $0x10] sm:$0xff]
  %v281 = vld [vmem:[%s71 + $0x18] sm:$0xff]
  %v282 = vld [vmem:[%s71 + $0x20] sm:$0xff]
  %v283 = vld [vmem:[%s71 + $0x28] sm:$0xff]
  %v284 = vld [vmem:[%s71 + $0x30] sm:$0xff]
  %v285 = vld [vmem:[%s71 + $0x38] sm:$0xff]
  %v286 = vld [vmem:[%s77] sm:$0xff]
  %v287 = vld [vmem:[%s77 + $0x8] sm:$0xff]
  %v288 = vld [vmem:[%s77 + $0x10] sm:$0xff]
  %v289 = vld [vmem:[%s77 + $0x18] sm:$0xff]
  %v290 = vld [vmem:[%s77 + $0x20] sm:$0xff]
  %v291 = vld [vmem:[%s77 + $0x28] sm:$0xff]
  %v292 = vld [vmem:[%s77 + $0x30] sm:$0xff]
  %v293 = vld [vmem:[%s77 + $0x38] sm:$0xff]
  %v294 = vld [vmem:[%s79] sm:$0xff]
  %v295 = vld [vmem:[%s79 + $0x8] sm:$0xff]
  %v296 = vld [vmem:[%s79 + $0x10] sm:$0xff]
  %v297 = vld [vmem:[%s79 + $0x18] sm:$0xff]
  %v298 = vld [vmem:[%s81] sm:$0x1]
  %v299 = vld [vmem:[%s83] sm:$0xff]
  %v300 = vld [vmem:[%s83 + $0x8] sm:$0xff]
  %v301 = vld [vmem:[%s83 + $0x10] sm:$0xff]
  %v302 = vld [vmem:[%s83 + $0x18] sm:$0xff]
  %v303 = vld [vmem:[%s85] sm:$0xff]
  %v304 = vld [vmem:[%s87] sm:$0xff]
  %v305 = vld [vmem:[%s87 + $0x8] sm:$0xff]
  %v306 = vld [vmem:[%s89] sm:$0xff]
  %v308 = vperm.slane %v209, 0
  %vm310 = vcmask 97280
  %v312 = vsel %vm310, %v304, 0
  %v315 = vsel %vm310, %v305, 0
  %vm317 = vcmask 1043456
  %v319 = vsel %vm317, %v213, 0
  %321 = vmatpush.msra.mxu0 0.0
  %322 = vmatpush.msra.mxu0 0.0
  %323 = vmatpush.msra.mxu0 0.0
  %324 = vmatpush.msra.mxu0 0.0
  %325 = vmatpush.msra.mxu0 0.0
  %326 = vmatpush.msra.mxu0 0.0
  %327 = vmatpush.msra.mxu0 0.0
  %328 = vmatpush.msra.mxu0 0.0
  %329 = vmatpush.msra.mxu0 0.0
  %330 = vmatpush.msra.mxu0 0.0
  %331 = vmatpush.msra.mxu0 0.0
  %332 = vmatpush.msra.mxu0 0.0
  %333 = vmatpush.msra.mxu0 0.0
  %334 = vmatpush.msra.mxu0 0.0
  %335 = vmatpush.msra.mxu0 %v319
  %336 = vmatpush.msra.mxu0 %v212
  %337 = vmatmul.f32.gmra.mxu0 %v312
  %v338 = vpop.f32.mrf.mxu0
  %v339 = vadd.f32 %v308, %v338
  %340 = vmatmul.f32.gmra.mxu0 %v315
  %v341 = vpop.f32.mrf.mxu0
  %v342 = vadd.f32 %v308, %v341
  %343 = vdwg.mxu0
  %vm344 = vcmask 261120
  %v345 = vsel %vm344, %v339, 0.0
  %346 = vadd.xlane.f32.xlu0 %v345
  %v347 = vpop.xlane.xlu0 %346
  %v348 = vsel %vm344, %v342, 0.0
  %349 = vadd.xlane.f32.xlu0 %v348
  %v350 = vpop.xlane.xlu0 %349
  %v351 = vrcp.pop 32.0
  %v352 = vmul.f32 32.0, %v351
  %v353 = vsub.f32 1.0, %v352
  %v354 = vmul.f32 %v351, %v353
  %v355 = vadd.f32 %v351, %v354
  %vm356 = vweird.f32 %v351
  %v357 = vsel %vm356, %v351, %v355
  %v358 = vmul.f32 %v347, %v357
  %v359 = vmul.f32 %v350, %v357
  %v360 = vsub.f32 %v339, %v358
  %v361 = vsub.f32 %v342, %v359
  %v362 = vmul.f32 %v360, %v360
  %v363 = vmul.f32 %v361, %v361
  %v364 = vsel %vm344, %v362, 0.0
  %365 = vadd.xlane.f32.xlu0 %v364
  %v366 = vpop.xlane.xlu0 %365
  %v367 = vsel %vm344, %v363, 0.0
  %368 = vadd.xlane.f32.xlu0 %v367
  %v369 = vpop.xlane.xlu0 %368
  %v370 = vmul.f32 %v366, %v357
  %v371 = vmul.f32 %v369, %v357
  %v372 = vadd.f32 %v370, 1e-05
  %v373 = vadd.f32 %v371, 1e-05
  %v374 = vrsqrt.pop %v372
  %v375 = vmul.f32 %v374, %v372
  %v376 = vmul.f32 %v375, %v374
  %v377 = vmul.f32 0.5, %v376
  %v378 = vsub.f32 1.5, %v377
  %v379 = vmul.f32 %v374, %v378
  %vm380 = vweird.f32 %v372
  %vm381 = vweird.f32 %v374
  %vm382 = vmor %vm380, %vm381
  %v383 = vsel %vm382, %v374, %v379
  %v384 = vrsqrt.pop %v373
  %v385 = vmul.f32 %v384, %v373
  %v386 = vmul.f32 %v385, %v384
  %v387 = vmul.f32 0.5, %v386
  %v388 = vsub.f32 1.5, %v387
  %v389 = vmul.f32 %v384, %v388
  %vm390 = vweird.f32 %v373
  %vm391 = vweird.f32 %v384
  %vm392 = vmor %vm390, %vm391
  %v393 = vsel %vm392, %v384, %v389
  %v394 = vmul.f32 %v360, %v383
  %v395 = vmul.f32 %v361, %v393
  %v397 = vperm.slane %v211, 0
  %v399 = vmul.f32 %v394, %v397
  %v400 = vmul.f32 %v395, %v397
  %v402 = vperm.slane %v210, 0
  %v404 = vadd.f32 %v399, %v402
  %v405 = vadd.f32 %v400, %v402
  %v406 = vmax.f32 %v404, 0.0
  %v407 = vmax.f32 %v405, 0.0
  %v409 = vperm.slane %v214, 0
  %vm411 = vcmask 80896
  %v413 = vsel %vm411, %v306, 0
  %vm415 = vcmask 1041408
  %v417 = vsel %vm415, %v218, 0
  %419 = vmatpush.msra.mxu0 0.0
  %420 = vmatpush.msra.mxu0 0.0
  %421 = vmatpush.msra.mxu0 0.0
  %422 = vmatpush.msra.mxu0 0.0
  %423 = vmatpush.msra.mxu0 0.0
  %424 = vmatpush.msra.mxu0 0.0
  %425 = vmatpush.msra.mxu0 0.0
  %426 = vmatpush.msra.mxu0 0.0
  %427 = vmatpush.msra.mxu0 0.0
  %428 = vmatpush.msra.mxu0 0.0
  %429 = vmatpush.msra.mxu0 0.0
  %430 = vmatpush.msra.mxu0 0.0
  %431 = vmatpush.msra.mxu0 0.0
  %432 = vmatpush.msra.mxu0 0.0
  %433 = vmatpush.msra.mxu0 %v417
  %434 = vmatpush.msra.mxu0 %v217
  %435 = vmatmul.f32.gmra.mxu0 %v413
  %v436 = vpop.f32.mrf.mxu0
  %v437 = vadd.f32 %v409, %v436
  %438 = vdwg.mxu0
  %v439 = vsel %vm344, %v437, 0.0
  %440 = vadd.xlane.f32.xlu0 %v439
  %v441 = vpop.xlane.xlu0 %440
  %v442 = vmul.f32 %v441, %v357
  %v443 = vsub.f32 %v437, %v442
  %v444 = vmul.f32 %v443, %v443
  %v445 = vsel %vm344, %v444, 0.0
  %446 = vadd.xlane.f32.xlu0 %v445
  %v447 = vpop.xlane.xlu0 %446
  %v448 = vmul.f32 %v447, %v357
  %v449 = vadd.f32 %v448, 1e-05
  %v450 = vrsqrt.pop %v449
  %v451 = vmul.f32 %v450, %v449
  %v452 = vmul.f32 %v451, %v450
  %v453 = vmul.f32 0.5, %v452
  %v454 = vsub.f32 1.5, %v453
  %v455 = vmul.f32 %v450, %v454
  %vm456 = vweird.f32 %v449
  %vm457 = vweird.f32 %v450
  %vm458 = vmor %vm456, %vm457
  %v459 = vsel %vm458, %v450, %v455
  %v460 = vmul.f32 %v443, %v459
  %v462 = vperm.slane %v216, 0
  %v464 = vmul.f32 %v460, %v462
  %v466 = vperm.slane %v215, 0
  %v468 = vadd.f32 %v464, %v466
  %v469 = vmax.f32 %v468, 0.0
  %v471 = vsel %vm344, %v406, 0
  %v474 = vsel %vm344, %v407, 0
  %476 = vmatpush.msra.mxu0 0.0
  %477 = vmatpush.msra.mxu0 0.0
  %478 = vmatpush.msra.mxu0 0.0
  %479 = vmatpush.msra.mxu0 0.0
  %480 = vmatpush.msra.mxu0 0.0
  %481 = vmatpush.msra.mxu0 0.0
  %482 = vmatpush.msra.mxu0 0.0
  %483 = vmatpush.msra.mxu0 0.0
  %484 = vmatpush.msra.mxu0 0.0
  %485 = vmatpush.msra.mxu0 0.0
  %486 = vmatpush.msra.mxu0 0.0
  %487 = vmatpush.msra.mxu0 0.0
  %488 = vmatpush.msra.mxu0 %v261
  %489 = vmatpush.msra.mxu0 %v259
  %490 = vmatpush.msra.mxu0 %v257
  %491 = vmatpush.msra.mxu0 %v255
  %492 = vmatmul.f32.gmra.mxu0 %v471
  %v493 = vpop.f32.mrf.mxu0
  %v494 = vadd.f32 0.0, %v493
  %495 = vmatmul.f32.gmra.mxu0 %v474
  %v496 = vpop.f32.mrf.mxu0
  %v497 = vadd.f32 0.0, %v496
  %498 = vdwg.mxu0
  %499 = vmatpush.msra.mxu0 0.0
  %500 = vmatpush.msra.mxu0 0.0
  %501 = vmatpush.msra.mxu0 0.0
  %502 = vmatpush.msra.mxu0 0.0
  %503 = vmatpush.msra.mxu0 0.0
  %504 = vmatpush.msra.mxu0 0.0
  %505 = vmatpush.msra.mxu0 0.0
  %506 = vmatpush.msra.mxu0 0.0
  %507 = vmatpush.msra.mxu0 0.0
  %508 = vmatpush.msra.mxu0 0.0
  %509 = vmatpush.msra.mxu0 0.0
  %510 = vmatpush.msra.mxu0 0.0
  %511 = vmatpush.msra.mxu0 %v262
  %512 = vmatpush.msra.mxu0 %v260
  %513 = vmatpush.msra.mxu0 %v258
  %514 = vmatpush.msra.mxu0 %v256
  %515 = vmatmul.f32.gmra.mxu0 %v471
  %v516 = vpop.f32.mrf.mxu0
  %v517 = vadd.f32 0.0, %v516
  %518 = vmatmul.f32.gmra.mxu0 %v474
  %v519 = vpop.f32.mrf.mxu0
  %v520 = vadd.f32 0.0, %v519
  %521 = vdwg.mxu0
  %v523 = vsel %vm344, %v469, 0
  %525 = vmatpush.msra.mxu0 0.0
  %526 = vmatpush.msra.mxu0 0.0
  %527 = vmatpush.msra.mxu0 0.0
  %528 = vmatpush.msra.mxu0 0.0
  %529 = vmatpush.msra.mxu0 0.0
  %530 = vmatpush.msra.mxu0 0.0
  %531 = vmatpush.msra.mxu0 0.0
  %532 = vmatpush.msra.mxu0 0.0
  %533 = vmatpush.msra.mxu0 0.0
  %534 = vmatpush.msra.mxu0 0.0
  %535 = vmatpush.msra.mxu0 0.0
  %536 = vmatpush.msra.mxu0 0.0
  %537 = vmatpush.msra.mxu0 %v266
  %538 = vmatpush.msra.mxu0 %v265
  %539 = vmatpush.msra.mxu0 %v264
  %540 = vmatpush.msra.mxu0 %v263
  %541 = vmatmul.f32.gmra.mxu0 %v523
  %v542 = vpop.f32.mrf.mxu0
  %v543 = vadd.f32 0.0, %v542
  %544 = vdwg.mxu0
  %546 = vrot.lane.b32.xlu0 %v543, 127
  %v547 = vpop.permute.xlu0 %546
  %548 = vset.pattern.permute.xlu0 64
  %549 = vperm.xlu0 %548, %v543
  %v550 = vpop.permute.xlu0 %549
  %552 = vset.pattern.permute.xlu0 64
  %553 = vperm.xlu0 %552, %v547
  %v554 = vpop.permute.xlu0 %553
  %v557 = vsel %vm344, %v224, 0
  %v560 = vsel %vm344, %v225, 0
  %562 = vmatpush.xpose.msra.mxu0 0.0
  %563 = vmatpush.xpose.msra.mxu0 0.0
  %564 = vmatpush.xpose.msra.mxu0 0.0
  %565 = vmatpush.xpose.msra.mxu0 0.0
  %566 = vmatpush.xpose.msra.mxu0 0.0
  %567 = vmatpush.xpose.msra.mxu0 0.0
  %568 = vmatpush.xpose.msra.mxu0 0.0
  %569 = vmatpush.xpose.msra.mxu0 0.0
  %570 = vmatpush.xpose.msra.mxu0 0.0
  %571 = vmatpush.xpose.msra.mxu0 0.0
  %572 = vmatpush.xpose.msra.mxu0 0.0
  %573 = vmatpush.xpose.msra.mxu0 0.0
  %574 = vmatpush.xpose.msra.mxu0 0.0
  %575 = vmatpush.xpose.msra.mxu0 0.0
  %576 = vmatpush.xpose.msra.mxu0 %v474
  %577 = vmatpush.xpose.msra.mxu0 %v471
  %578 = vmatmul.f32.gmra.mxu0 %v557
  %v579 = vpop.f32.mrf.mxu0
  %v580 = vadd.f32 %v550, %v579
  %581 = vmatmul.f32.gmra.mxu0 %v560
  %v582 = vpop.f32.mrf.mxu0
  %v583 = vadd.f32 %v554, %v582
  %584 = vdwg.mxu0
  %v585 = vmul.f32 %v580, 0.2
  %v586 = vmul.f32 %v583, 0.2
  %v587 = vmax.f32 %v580, %v585
  %v588 = vmax.f32 %v583, %v586
  %v589 = vadd.f32 %v587, %v199
  %v590 = vadd.f32 %v588, %v200
  %vm591 = vcmask 130048
  %v592 = vsel %vm591, %v589, -inf
  %593 = vmax.xlane.f32.xlu0 %v592
  %v594 = vpop.xlane.xlu0 %593
  %v595 = vsel %vm591, %v590, -inf
  %596 = vmax.xlane.f32.xlu0 %v595
  %v597 = vpop.xlane.xlu0 %596
  %v598 = vsub.f32 %v589, %v594
  %v599 = vsub.f32 %v590, %v597
  %v600 = vmul.f32 %v598, 1.442695
  %v601 = vpow.pop %v600
  %v602 = vmul.f32 %v599, 1.442695
  %v603 = vpow.pop %v602
  %v604 = vmul.f32 %v601, %v189
  %v605 = vmul.f32 %v603, %v190
  %v606 = vsel %vm591, %v604, 0.0
  %607 = vadd.xlane.f32.xlu0 %v606
  %v608 = vpop.xlane.xlu0 %607
  %v609 = vsel %vm591, %v605, 0.0
  %610 = vadd.xlane.f32.xlu0 %v609
  %v611 = vpop.xlane.xlu0 %610
  %v612 = vmax.f32 %v608, 1e-16
  %v613 = vmax.f32 %v611, 1e-16
  %v614 = vrcp.pop %v612
  %v615 = vrcp.pop %v613
  %v616 = vmul.f32 %v604, %v614
  %v617 = vmul.f32 %v605, %v615
  %v619 = vsel %vm591, %v616, 0
  %v622 = vsel %vm591, %v617, 0
  %624 = vmatpush.msra.mxu0 0.0
  %625 = vmatpush.msra.mxu0 0.0
  %626 = vmatpush.msra.mxu0 0.0
  %627 = vmatpush.msra.mxu0 0.0
  %628 = vmatpush.msra.mxu0 0.0
  %629 = vmatpush.msra.mxu0 0.0
  %630 = vmatpush.msra.mxu0 0.0
  %631 = vmatpush.msra.mxu0 0.0
  %632 = vmatpush.msra.mxu0 0.0
  %633 = vmatpush.msra.mxu0 0.0
  %634 = vmatpush.msra.mxu0 0.0
  %635 = vmatpush.msra.mxu0 0.0
  %636 = vmatpush.msra.mxu0 0.0
  %637 = vmatpush.msra.mxu0 0.0
  %638 = vmatpush.msra.mxu0 %v497
  %639 = vmatpush.msra.mxu0 %v494
  %640 = vmatmul.f32.gmra.mxu0 %v619
  %v641 = vpop.f32.mrf.mxu0
  %v642 = vadd.f32 0.0, %v641
  %643 = vmatmul.f32.gmra.mxu0 %v622
  %v644 = vpop.f32.mrf.mxu0
  %v645 = vadd.f32 0.0, %v644
  %646 = vdwg.mxu0
  %v647 = vsel %vm344, %v642, %v645
  %v649 = vperm.slane %v234, 0
  %v651 = vadd.f32 %v647, %v649
  %654 = vrot.lane.b32.xlu0 %v517, 127
  %v655 = vpop.permute.xlu0 %654
  %656 = vrot.lane.b32.xlu0 %v520, 127
  %v657 = vpop.permute.xlu0 %656
  %658 = vset.pattern.permute.xlu0 0
  %659 = vperm.xlu0 %658, %v517
  %v660 = vpop.permute.xlu0 %659
  %662 = vset.pattern.permute.xlu0 0
  %663 = vperm.xlu0 %662, %v520
  %v664 = vpop.permute.xlu0 %663
  %666 = vset.pattern.permute.xlu0 0
  %667 = vperm.xlu0 %666, %v655
  %v668 = vpop.permute.xlu0 %667
  %670 = vset.pattern.permute.xlu0 0
  %671 = vperm.xlu0 %670, %v657
  %v672 = vpop.permute.xlu0 %671
  %v675 = vsel %vm344, %v230, 0
  %v678 = vsel %vm344, %v231, 0
  %v681 = vsel %vm344, %v232, 0
  %v684 = vsel %vm344, %v233, 0
  %686 = vmatpush.xpose.msra.mxu0 0.0
  %687 = vmatpush.xpose.msra.mxu0 0.0
  %688 = vmatpush.xpose.msra.mxu0 0.0
  %689 = vmatpush.xpose.msra.mxu0 0.0
  %690 = vmatpush.xpose.msra.mxu0 0.0
  %691 = vmatpush.xpose.msra.mxu0 0.0
  %692 = vmatpush.xpose.msra.mxu0 0.0
  %693 = vmatpush.xpose.msra.mxu0 0.0
  %694 = vmatpush.xpose.msra.mxu0 0.0
  %695 = vmatpush.xpose.msra.mxu0 0.0
  %696 = vmatpush.xpose.msra.mxu0 0.0
  %697 = vmatpush.xpose.msra.mxu0 0.0
  %698 = vmatpush.xpose.msra.mxu0 0.0
  %699 = vmatpush.xpose.msra.mxu0 0.0
  %700 = vmatpush.xpose.msra.mxu0 0.0
  %701 = vmatpush.xpose.msra.mxu0 %v523
  %702 = vmatmul.f32.gmra.mxu0 %v675
  %v703 = vpop.f32.mrf.mxu0
  %v704 = vadd.f32 %v660, %v703
  %705 = vmatmul.f32.gmra.mxu0 %v678
  %v706 = vpop.f32.mrf.mxu0
  %v707 = vadd.f32 %v664, %v706
  %708 = vmatmul.f32.gmra.mxu0 %v681
  %v709 = vpop.f32.mrf.mxu0
  %v710 = vadd.f32 %v668, %v709
  %711 = vmatmul.f32.gmra.mxu0 %v684
  %v712 = vpop.f32.mrf.mxu0
  %v713 = vadd.f32 %v672, %v712
  %714 = vdwg.mxu0
  %v715 = vmul.f32 %v704, 0.2
  %v716 = vmul.f32 %v707, 0.2
  %v717 = vmul.f32 %v710, 0.2
  %v718 = vmul.f32 %v713, 0.2
  %v719 = vmax.f32 %v704, %v715
  %v720 = vmax.f32 %v707, %v716
  %v721 = vmax.f32 %v710, %v717
  %v722 = vmax.f32 %v713, %v718
  %v723 = vadd.f32 %v719, %v205
  %v724 = vadd.f32 %v720, %v206
  %v725 = vadd.f32 %v721, %v207
  %v726 = vadd.f32 %v722, %v208
  %vm727 = vcmask 64512
  %v728 = vsel %vm727, %v723, -inf
  %729 = vmax.xlane.f32.xlu0 %v728
  %v730 = vpop.xlane.xlu0 %729
  %v731 = vsel %vm727, %v724, -inf
  %732 = vmax.xlane.f32.xlu0 %v731
  %v733 = vpop.xlane.xlu0 %732
  %v734 = vsel %vm727, %v725, -inf
  %735 = vmax.xlane.f32.xlu0 %v734
  %v736 = vpop.xlane.xlu0 %735
  %v737 = vsel %vm727, %v726, -inf
  %738 = vmax.xlane.f32.xlu0 %v737
  %v739 = vpop.xlane.xlu0 %738
  %v740 = vsub.f32 %v723, %v730
  %v741 = vsub.f32 %v724, %v733
  %v742 = vsub.f32 %v725, %v736
  %v743 = vsub.f32 %v726, %v739
  %v744 = vmul.f32 %v740, 1.442695
  %v745 = vpow.pop %v744
  %v746 = vmul.f32 %v741, 1.442695
  %v747 = vpow.pop %v746
  %v748 = vmul.f32 %v742, 1.442695
  %v749 = vpow.pop %v748
  %v750 = vmul.f32 %v743, 1.442695
  %v751 = vpow.pop %v750
  %v752 = vmul.f32 %v745, %v195
  %v753 = vmul.f32 %v747, %v196
  %v754 = vmul.f32 %v749, %v197
  %v755 = vmul.f32 %v751, %v198
  %v756 = vsel %vm727, %v752, 0.0
  %757 = vadd.xlane.f32.xlu0 %v756
  %v758 = vpop.xlane.xlu0 %757
  %v759 = vsel %vm727, %v753, 0.0
  %760 = vadd.xlane.f32.xlu0 %v759
  %v761 = vpop.xlane.xlu0 %760
  %v762 = vsel %vm727, %v754, 0.0
  %763 = vadd.xlane.f32.xlu0 %v762
  %v764 = vpop.xlane.xlu0 %763
  %v765 = vsel %vm727, %v755, 0.0
  %766 = vadd.xlane.f32.xlu0 %v765
  %v767 = vpop.xlane.xlu0 %766
  %v768 = vmax.f32 %v758, 1e-16
  %v769 = vmax.f32 %v761, 1e-16
  %v770 = vmax.f32 %v764, 1e-16
  %v771 = vmax.f32 %v767, 1e-16
  %v772 = vrcp.pop %v768
  %v773 = vrcp.pop %v769
  %v774 = vrcp.pop %v770
  %v775 = vrcp.pop %v771
  %v776 = vmul.f32 %v752, %v772
  %v777 = vmul.f32 %v753, %v773
  %v778 = vmul.f32 %v754, %v774
  %v779 = vmul.f32 %v755, %v775
  %v781 = vsel %vm727, %v776, 0
  %v784 = vsel %vm727, %v777, 0
  %v787 = vsel %vm727, %v778, 0
  %v790 = vsel %vm727, %v779, 0
  %792 = vmatpush.msra.mxu0 0.0
  %793 = vmatpush.msra.mxu0 0.0
  %794 = vmatpush.msra.mxu0 0.0
  %795 = vmatpush.msra.mxu0 0.0
  %796 = vmatpush.msra.mxu0 0.0
  %797 = vmatpush.msra.mxu0 0.0
  %798 = vmatpush.msra.mxu0 0.0
  %799 = vmatpush.msra.mxu0 0.0
  %800 = vmatpush.msra.mxu0 0.0
  %801 = vmatpush.msra.mxu0 0.0
  %802 = vmatpush.msra.mxu0 0.0
  %803 = vmatpush.msra.mxu0 0.0
  %804 = vmatpush.msra.mxu0 0.0
  %805 = vmatpush.msra.mxu0 0.0
  %806 = vmatpush.msra.mxu0 0.0
  %807 = vmatpush.msra.mxu0 %v543
  %808 = vmatmul.f32.gmra.mxu0 %v781
  %v809 = vpop.f32.mrf.mxu0
  %v810 = vadd.f32 0.0, %v809
  %811 = vmatmul.f32.gmra.mxu0 %v784
  %v812 = vpop.f32.mrf.mxu0
  %v813 = vadd.f32 0.0, %v812
  %814 = vmatmul.f32.gmra.mxu0 %v787
  %v815 = vpop.f32.mrf.mxu0
  %v816 = vadd.f32 0.0, %v815
  %817 = vmatmul.f32.gmra.mxu0 %v790
  %v818 = vpop.f32.mrf.mxu0
  %v819 = vadd.f32 0.0, %v818
  %820 = vdwg.mxu0
  %v821 = vsel %vm344, %v810, %v816
  %v822 = vsel %vm344, %v813, %v819
  %v824 = vperm.slane %v236, 0
  %v826 = vadd.f32 %v821, %v824
  %v827 = vadd.f32 %v822, %v824
  %828 = vset.pattern.permute.xlu0 2
  %829 = vperm.xlu0 %828, %v517
  %v830 = vpop.permute.xlu0 %829
  %832 = vset.pattern.permute.xlu0 2
  %833 = vperm.xlu0 %832, %v520
  %v834 = vpop.permute.xlu0 %833
  %836 = vset.pattern.permute.xlu0 2
  %837 = vperm.xlu0 %836, %v655
  %v838 = vpop.permute.xlu0 %837
  %840 = vset.pattern.permute.xlu0 2
  %841 = vperm.xlu0 %840, %v657
  %v842 = vpop.permute.xlu0 %841
  %v845 = vsel %vm344, %v226, 0
  %v848 = vsel %vm344, %v227, 0
  %v851 = vsel %vm344, %v228, 0
  %v854 = vsel %vm344, %v229, 0
  %856 = vmatpush.xpose.msra.mxu0 0.0
  %857 = vmatpush.xpose.msra.mxu0 0.0
  %858 = vmatpush.xpose.msra.mxu0 0.0
  %859 = vmatpush.xpose.msra.mxu0 0.0
  %860 = vmatpush.xpose.msra.mxu0 0.0
  %861 = vmatpush.xpose.msra.mxu0 0.0
  %862 = vmatpush.xpose.msra.mxu0 0.0
  %863 = vmatpush.xpose.msra.mxu0 0.0
  %864 = vmatpush.xpose.msra.mxu0 0.0
  %865 = vmatpush.xpose.msra.mxu0 0.0
  %866 = vmatpush.xpose.msra.mxu0 0.0
  %867 = vmatpush.xpose.msra.mxu0 0.0
  %868 = vmatpush.xpose.msra.mxu0 0.0
  %869 = vmatpush.xpose.msra.mxu0 0.0
  %870 = vmatpush.xpose.msra.mxu0 %v474
  %871 = vmatpush.xpose.msra.mxu0 %v471
  %872 = vmatmul.f32.gmra.mxu0 %v845
  %v873 = vpop.f32.mrf.mxu0
  %v874 = vadd.f32 %v830, %v873
  %875 = vmatmul.f32.gmra.mxu0 %v848
  %v876 = vpop.f32.mrf.mxu0
  %v877 = vadd.f32 %v834, %v876
  %878 = vmatmul.f32.gmra.mxu0 %v851
  %v879 = vpop.f32.mrf.mxu0
  %v880 = vadd.f32 %v838, %v879
  %881 = vmatmul.f32.gmra.mxu0 %v854
  %v882 = vpop.f32.mrf.mxu0
  %v883 = vadd.f32 %v842, %v882
  %884 = vdwg.mxu0
  %v885 = vmul.f32 %v874, 0.2
  %v886 = vmul.f32 %v877, 0.2
  %v887 = vmul.f32 %v880, 0.2
  %v888 = vmul.f32 %v883, 0.2
  %v889 = vmax.f32 %v874, %v885
  %v890 = vmax.f32 %v877, %v886
  %v891 = vmax.f32 %v880, %v887
  %v892 = vmax.f32 %v883, %v888
  %v893 = vadd.f32 %v889, %v201
  %v894 = vadd.f32 %v890, %v202
  %v895 = vadd.f32 %v891, %v203
  %v896 = vadd.f32 %v892, %v204
  %v897 = vsel %vm591, %v893, -inf
  %898 = vmax.xlane.f32.xlu0 %v897
  %v899 = vpop.xlane.xlu0 %898
  %v900 = vsel %vm591, %v894, -inf
  %901 = vmax.xlane.f32.xlu0 %v900
  %v902 = vpop.xlane.xlu0 %901
  %v903 = vsel %vm591, %v895, -inf
  %904 = vmax.xlane.f32.xlu0 %v903
  %v905 = vpop.xlane.xlu0 %904
  %v906 = vsel %vm591, %v896, -inf
  %907 = vmax.xlane.f32.xlu0 %v906
  %v908 = vpop.xlane.xlu0 %907
  %v909 = vsub.f32 %v893, %v899
  %v910 = vsub.f32 %v894, %v902
  %v911 = vsub.f32 %v895, %v905
  %v912 = vsub.f32 %v896, %v908
  %v913 = vmul.f32 %v909, 1.442695
  %v914 = vpow.pop %v913
  %v915 = vmul.f32 %v910, 1.442695
  %v916 = vpow.pop %v915
  %v917 = vmul.f32 %v911, 1.442695
  %v918 = vpow.pop %v917
  %v919 = vmul.f32 %v912, 1.442695
  %v920 = vpow.pop %v919
  %v921 = vmul.f32 %v914, %v191
  %v922 = vmul.f32 %v916, %v192
  %v923 = vmul.f32 %v918, %v193
  %v924 = vmul.f32 %v920, %v194
  %v925 = vsel %vm591, %v921, 0.0
  %926 = vadd.xlane.f32.xlu0 %v925
  %v927 = vpop.xlane.xlu0 %926
  %v928 = vsel %vm591, %v922, 0.0
  %929 = vadd.xlane.f32.xlu0 %v928
  %v930 = vpop.xlane.xlu0 %929
  %v931 = vsel %vm591, %v923, 0.0
  %932 = vadd.xlane.f32.xlu0 %v931
  %v933 = vpop.xlane.xlu0 %932
  %v934 = vsel %vm591, %v924, 0.0
  %935 = vadd.xlane.f32.xlu0 %v934
  %v936 = vpop.xlane.xlu0 %935
  %v937 = vmax.f32 %v927, 1e-16
  %v938 = vmax.f32 %v930, 1e-16
  %v939 = vmax.f32 %v933, 1e-16
  %v940 = vmax.f32 %v936, 1e-16
  %v941 = vrcp.pop %v937
  %v942 = vrcp.pop %v938
  %v943 = vrcp.pop %v939
  %v944 = vrcp.pop %v940
  %v945 = vmul.f32 %v921, %v941
  %v946 = vmul.f32 %v922, %v942
  %v947 = vmul.f32 %v923, %v943
  %v948 = vmul.f32 %v924, %v944
  %951 = vrot.lane.b32.xlu0 %v494, 64
  %v952 = vpop.permute.xlu0 %951
  %953 = vrot.lane.b32.xlu0 %v497, 64
  %v954 = vpop.permute.xlu0 %953
  %v958 = vsel %vm591, %v945, 0
  %v961 = vsel %vm591, %v946, 0
  %v964 = vsel %vm591, %v947, 0
  %v967 = vsel %vm591, %v948, 0
  %969 = vmatpush.msra.mxu0 0.0
  %970 = vmatpush.msra.mxu0 0.0
  %971 = vmatpush.msra.mxu0 0.0
  %972 = vmatpush.msra.mxu0 0.0
  %973 = vmatpush.msra.mxu0 0.0
  %974 = vmatpush.msra.mxu0 0.0
  %975 = vmatpush.msra.mxu0 0.0
  %976 = vmatpush.msra.mxu0 0.0
  %977 = vmatpush.msra.mxu0 0.0
  %978 = vmatpush.msra.mxu0 0.0
  %979 = vmatpush.msra.mxu0 0.0
  %980 = vmatpush.msra.mxu0 0.0
  %981 = vmatpush.msra.mxu0 0.0
  %982 = vmatpush.msra.mxu0 0.0
  %983 = vmatpush.msra.mxu0 %v954
  %984 = vmatpush.msra.mxu0 %v952
  %985 = vmatmul.f32.gmra.mxu0 %v958
  %v986 = vpop.f32.mrf.mxu0
  %v987 = vadd.f32 0.0, %v986
  %988 = vmatmul.f32.gmra.mxu0 %v961
  %v989 = vpop.f32.mrf.mxu0
  %v990 = vadd.f32 0.0, %v989
  %991 = vmatmul.f32.gmra.mxu0 %v964
  %v992 = vpop.f32.mrf.mxu0
  %v993 = vadd.f32 0.0, %v992
  %994 = vmatmul.f32.gmra.mxu0 %v967
  %v995 = vpop.f32.mrf.mxu0
  %v996 = vadd.f32 0.0, %v995
  %997 = vdwg.mxu0
  %v998 = vsel %vm344, %v987, %v993
  %v999 = vsel %vm344, %v990, %v996
  %v1001 = vperm.slane %v235, 0
  %v1003 = vadd.f32 %v998, %v1001
  %v1004 = vadd.f32 %v999, %v1001
  %v1005 = vadd.f32 %v826, %v1003
  %v1006 = vadd.f32 %v827, %v1004
  %v1008 = vperm.slane %v237, 0
  %vm1010 = vcmask 523264
  %v1012 = vsel %vm1010, %v1005, 0
  %v1015 = vsel %vm1010, %v1006, 0
  %1017 = vmatpush.msra.mxu0 0.0
  %1018 = vmatpush.msra.mxu0 0.0
  %1019 = vmatpush.msra.mxu0 0.0
  %1020 = vmatpush.msra.mxu0 0.0
  %1021 = vmatpush.msra.mxu0 0.0
  %1022 = vmatpush.msra.mxu0 0.0
  %1023 = vmatpush.msra.mxu0 0.0
  %1024 = vmatpush.msra.mxu0 0.0
  %1025 = vmatpush.msra.mxu0 %v245
  %1026 = vmatpush.msra.mxu0 %v244
  %1027 = vmatpush.msra.mxu0 %v243
  %1028 = vmatpush.msra.mxu0 %v242
  %1029 = vmatpush.msra.mxu0 %v241
  %1030 = vmatpush.msra.mxu0 %v240
  %1031 = vmatpush.msra.mxu0 %v239
  %1032 = vmatpush.msra.mxu0 %v238
  %1033 = vmatmul.f32.gmra.mxu0 %v1012
  %v1034 = vpop.f32.mrf.mxu0
  %v1035 = vadd.f32 %v1008, %v1034
  %1036 = vmatmul.f32.gmra.mxu0 %v1015
  %v1037 = vpop.f32.mrf.mxu0
  %v1038 = vadd.f32 %v1008, %v1037
  %1039 = vdwg.mxu0
  %v1040 = vmax.f32 %v1035, 0.0
  %v1041 = vmax.f32 %v1038, 0.0
  %v1043 = vperm.slane %v246, 0
  %v1046 = vsel %vm1010, %v651, 0
  %1048 = vmatpush.msra.mxu0 0.0
  %1049 = vmatpush.msra.mxu0 0.0
  %1050 = vmatpush.msra.mxu0 0.0
  %1051 = vmatpush.msra.mxu0 0.0
  %1052 = vmatpush.msra.mxu0 0.0
  %1053 = vmatpush.msra.mxu0 0.0
  %1054 = vmatpush.msra.mxu0 0.0
  %1055 = vmatpush.msra.mxu0 0.0
  %1056 = vmatpush.msra.mxu0 %v254
  %1057 = vmatpush.msra.mxu0 %v253
  %1058 = vmatpush.msra.mxu0 %v252
  %1059 = vmatpush.msra.mxu0 %v251
  %1060 = vmatpush.msra.mxu0 %v250
  %1061 = vmatpush.msra.mxu0 %v249
  %1062 = vmatpush.msra.mxu0 %v248
  %1063 = vmatpush.msra.mxu0 %v247
  %1064 = vmatmul.f32.gmra.mxu0 %v1046
  %v1065 = vpop.f32.mrf.mxu0
  %v1066 = vadd.f32 %v1043, %v1065
  %1067 = vdwg.mxu0
  %v1068 = vmax.f32 %v1066, 0.0
  %v1070 = vsel %vm344, %v1040, 0
  %v1073 = vsel %vm344, %v1041, 0
  %1075 = vmatpush.msra.mxu0 0.0
  %1076 = vmatpush.msra.mxu0 0.0
  %1077 = vmatpush.msra.mxu0 0.0
  %1078 = vmatpush.msra.mxu0 0.0
  %1079 = vmatpush.msra.mxu0 0.0
  %1080 = vmatpush.msra.mxu0 0.0
  %1081 = vmatpush.msra.mxu0 0.0
  %1082 = vmatpush.msra.mxu0 0.0
  %1083 = vmatpush.msra.mxu0 0.0
  %1084 = vmatpush.msra.mxu0 0.0
  %1085 = vmatpush.msra.mxu0 0.0
  %1086 = vmatpush.msra.mxu0 0.0
  %1087 = vmatpush.msra.mxu0 %v292
  %1088 = vmatpush.msra.mxu0 %v290
  %1089 = vmatpush.msra.mxu0 %v288
  %1090 = vmatpush.msra.mxu0 %v286
  %1091 = vmatmul.f32.gmra.mxu0 %v1070
  %v1092 = vpop.f32.mrf.mxu0
  %v1093 = vadd.f32 0.0, %v1092
  %1094 = vmatmul.f32.gmra.mxu0 %v1073
  %v1095 = vpop.f32.mrf.mxu0
  %v1096 = vadd.f32 0.0, %v1095
  %1097 = vdwg.mxu0
  %1098 = vmatpush.msra.mxu0 0.0
  %1099 = vmatpush.msra.mxu0 0.0
  %1100 = vmatpush.msra.mxu0 0.0
  %1101 = vmatpush.msra.mxu0 0.0
  %1102 = vmatpush.msra.mxu0 0.0
  %1103 = vmatpush.msra.mxu0 0.0
  %1104 = vmatpush.msra.mxu0 0.0
  %1105 = vmatpush.msra.mxu0 0.0
  %1106 = vmatpush.msra.mxu0 0.0
  %1107 = vmatpush.msra.mxu0 0.0
  %1108 = vmatpush.msra.mxu0 0.0
  %1109 = vmatpush.msra.mxu0 0.0
  %1110 = vmatpush.msra.mxu0 %v293
  %1111 = vmatpush.msra.mxu0 %v291
  %1112 = vmatpush.msra.mxu0 %v289
  %1113 = vmatpush.msra.mxu0 %v287
  %1114 = vmatmul.f32.gmra.mxu0 %v1070
  %v1115 = vpop.f32.mrf.mxu0
  %v1116 = vadd.f32 0.0, %v1115
  %1117 = vmatmul.f32.gmra.mxu0 %v1073
  %v1118 = vpop.f32.mrf.mxu0
  %v1119 = vadd.f32 0.0, %v1118
  %1120 = vdwg.mxu0
  %v1122 = vsel %vm344, %v1068, 0
  %1124 = vmatpush.msra.mxu0 0.0
  %1125 = vmatpush.msra.mxu0 0.0
  %1126 = vmatpush.msra.mxu0 0.0
  %1127 = vmatpush.msra.mxu0 0.0
  %1128 = vmatpush.msra.mxu0 0.0
  %1129 = vmatpush.msra.mxu0 0.0
  %1130 = vmatpush.msra.mxu0 0.0
  %1131 = vmatpush.msra.mxu0 0.0
  %1132 = vmatpush.msra.mxu0 0.0
  %1133 = vmatpush.msra.mxu0 0.0
  %1134 = vmatpush.msra.mxu0 0.0
  %1135 = vmatpush.msra.mxu0 0.0
  %1136 = vmatpush.msra.mxu0 %v297
  %1137 = vmatpush.msra.mxu0 %v296
  %1138 = vmatpush.msra.mxu0 %v295
  %1139 = vmatpush.msra.mxu0 %v294
  %1140 = vmatmul.f32.gmra.mxu0 %v1122
  %v1141 = vpop.f32.mrf.mxu0
  %v1142 = vadd.f32 0.0, %v1141
  %1143 = vdwg.mxu0
  %1146 = vrot.lane.b32.xlu0 %v1116, 127
  %v1147 = vpop.permute.xlu0 %1146
  %1148 = vrot.lane.b32.xlu0 %v1119, 127
  %v1149 = vpop.permute.xlu0 %1148
  %1150 = vset.pattern.permute.xlu0 0
  %1151 = vperm.xlu0 %1150, %v1116
  %v1152 = vpop.permute.xlu0 %1151
  %1154 = vset.pattern.permute.xlu0 0
  %1155 = vperm.xlu0 %1154, %v1119
  %v1156 = vpop.permute.xlu0 %1155
  %1158 = vset.pattern.permute.xlu0 0
  %1159 = vperm.xlu0 %1158, %v1147
  %v1160 = vpop.permute.xlu0 %1159
  %1162 = vset.pattern.permute.xlu0 0
  %1163 = vperm.xlu0 %1162, %v1149
  %v1164 = vpop.permute.xlu0 %1163
  %v1167 = vsel %vm344, %v271, 0
  %v1170 = vsel %vm344, %v272, 0
  %v1173 = vsel %vm344, %v273, 0
  %v1176 = vsel %vm344, %v274, 0
  %1178 = vmatpush.xpose.msra.mxu0 0.0
  %1179 = vmatpush.xpose.msra.mxu0 0.0
  %1180 = vmatpush.xpose.msra.mxu0 0.0
  %1181 = vmatpush.xpose.msra.mxu0 0.0
  %1182 = vmatpush.xpose.msra.mxu0 0.0
  %1183 = vmatpush.xpose.msra.mxu0 0.0
  %1184 = vmatpush.xpose.msra.mxu0 0.0
  %1185 = vmatpush.xpose.msra.mxu0 0.0
  %1186 = vmatpush.xpose.msra.mxu0 0.0
  %1187 = vmatpush.xpose.msra.mxu0 0.0
  %1188 = vmatpush.xpose.msra.mxu0 0.0
  %1189 = vmatpush.xpose.msra.mxu0 0.0
  %1190 = vmatpush.xpose.msra.mxu0 0.0
  %1191 = vmatpush.xpose.msra.mxu0 0.0
  %1192 = vmatpush.xpose.msra.mxu0 0.0
  %1193 = vmatpush.xpose.msra.mxu0 %v1122
  %1194 = vmatmul.f32.gmra.mxu0 %v1167
  %v1195 = vpop.f32.mrf.mxu0
  %v1196 = vadd.f32 %v1152, %v1195
  %1197 = vmatmul.f32.gmra.mxu0 %v1170
  %v1198 = vpop.f32.mrf.mxu0
  %v1199 = vadd.f32 %v1156, %v1198
  %1200 = vmatmul.f32.gmra.mxu0 %v1173
  %v1201 = vpop.f32.mrf.mxu0
  %v1202 = vadd.f32 %v1160, %v1201
  %1203 = vmatmul.f32.gmra.mxu0 %v1176
  %v1204 = vpop.f32.mrf.mxu0
  %v1205 = vadd.f32 %v1164, %v1204
  %1206 = vdwg.mxu0
  %v1207 = vmul.f32 %v1196, 0.2
  %v1208 = vmul.f32 %v1199, 0.2
  %v1209 = vmul.f32 %v1202, 0.2
  %v1210 = vmul.f32 %v1205, 0.2
  %v1211 = vmax.f32 %v1196, %v1207
  %v1212 = vmax.f32 %v1199, %v1208
  %v1213 = vmax.f32 %v1202, %v1209
  %v1214 = vmax.f32 %v1205, %v1210
  %v1215 = vadd.f32 %v1211, %v205
  %v1216 = vadd.f32 %v1212, %v206
  %v1217 = vadd.f32 %v1213, %v207
  %v1218 = vadd.f32 %v1214, %v208
  %v1219 = vsel %vm727, %v1215, -inf
  %1220 = vmax.xlane.f32.xlu0 %v1219
  %v1221 = vpop.xlane.xlu0 %1220
  %v1222 = vsel %vm727, %v1216, -inf
  %1223 = vmax.xlane.f32.xlu0 %v1222
  %v1224 = vpop.xlane.xlu0 %1223
  %v1225 = vsel %vm727, %v1217, -inf
  %1226 = vmax.xlane.f32.xlu0 %v1225
  %v1227 = vpop.xlane.xlu0 %1226
  %v1228 = vsel %vm727, %v1218, -inf
  %1229 = vmax.xlane.f32.xlu0 %v1228
  %v1230 = vpop.xlane.xlu0 %1229
  %v1231 = vsub.f32 %v1215, %v1221
  %v1232 = vsub.f32 %v1216, %v1224
  %v1233 = vsub.f32 %v1217, %v1227
  %v1234 = vsub.f32 %v1218, %v1230
  %v1235 = vmul.f32 %v1231, 1.442695
  %v1236 = vpow.pop %v1235
  %v1237 = vmul.f32 %v1232, 1.442695
  %v1238 = vpow.pop %v1237
  %v1239 = vmul.f32 %v1233, 1.442695
  %v1240 = vpow.pop %v1239
  %v1241 = vmul.f32 %v1234, 1.442695
  %v1242 = vpow.pop %v1241
  %v1243 = vmul.f32 %v1236, %v195
  %v1244 = vmul.f32 %v1238, %v196
  %v1245 = vmul.f32 %v1240, %v197
  %v1246 = vmul.f32 %v1242, %v198
  %v1247 = vsel %vm727, %v1243, 0.0
  %1248 = vadd.xlane.f32.xlu0 %v1247
  %v1249 = vpop.xlane.xlu0 %1248
  %v1250 = vsel %vm727, %v1244, 0.0
  %1251 = vadd.xlane.f32.xlu0 %v1250
  %v1252 = vpop.xlane.xlu0 %1251
  %v1253 = vsel %vm727, %v1245, 0.0
  %1254 = vadd.xlane.f32.xlu0 %v1253
  %v1255 = vpop.xlane.xlu0 %1254
  %v1256 = vsel %vm727, %v1246, 0.0
  %1257 = vadd.xlane.f32.xlu0 %v1256
  %v1258 = vpop.xlane.xlu0 %1257
  %v1259 = vmax.f32 %v1249, 1e-16
  %v1260 = vmax.f32 %v1252, 1e-16
  %v1261 = vmax.f32 %v1255, 1e-16
  %v1262 = vmax.f32 %v1258, 1e-16
  %v1263 = vrcp.pop %v1259
  %v1264 = vrcp.pop %v1260
  %v1265 = vrcp.pop %v1261
  %v1266 = vrcp.pop %v1262
  %v1267 = vmul.f32 %v1243, %v1263
  %v1268 = vmul.f32 %v1244, %v1264
  %v1269 = vmul.f32 %v1245, %v1265
  %v1270 = vmul.f32 %v1246, %v1266
  %v1272 = vsel %vm727, %v1267, 0
  %v1275 = vsel %vm727, %v1268, 0
  %v1278 = vsel %vm727, %v1269, 0
  %v1281 = vsel %vm727, %v1270, 0
  %1283 = vmatpush.msra.mxu0 0.0
  %1284 = vmatpush.msra.mxu0 0.0
  %1285 = vmatpush.msra.mxu0 0.0
  %1286 = vmatpush.msra.mxu0 0.0
  %1287 = vmatpush.msra.mxu0 0.0
  %1288 = vmatpush.msra.mxu0 0.0
  %1289 = vmatpush.msra.mxu0 0.0
  %1290 = vmatpush.msra.mxu0 0.0
  %1291 = vmatpush.msra.mxu0 0.0
  %1292 = vmatpush.msra.mxu0 0.0
  %1293 = vmatpush.msra.mxu0 0.0
  %1294 = vmatpush.msra.mxu0 0.0
  %1295 = vmatpush.msra.mxu0 0.0
  %1296 = vmatpush.msra.mxu0 0.0
  %1297 = vmatpush.msra.mxu0 0.0
  %1298 = vmatpush.msra.mxu0 %v1142
  %1299 = vmatmul.f32.gmra.mxu0 %v1272
  %v1300 = vpop.f32.mrf.mxu0
  %v1301 = vadd.f32 0.0, %v1300
  %1302 = vmatmul.f32.gmra.mxu0 %v1275
  %v1303 = vpop.f32.mrf.mxu0
  %v1304 = vadd.f32 0.0, %v1303
  %1305 = vmatmul.f32.gmra.mxu0 %v1278
  %v1306 = vpop.f32.mrf.mxu0
  %v1307 = vadd.f32 0.0, %v1306
  %1308 = vmatmul.f32.gmra.mxu0 %v1281
  %v1309 = vpop.f32.mrf.mxu0
  %v1310 = vadd.f32 0.0, %v1309
  %1311 = vdwg.mxu0
  %v1312 = vsel %vm344, %v1301, %v1307
  %v1313 = vsel %vm344, %v1304, %v1310
  %v1315 = vperm.slane %v276, 0
  %v1317 = vadd.f32 %v1312, %v1315
  %v1318 = vadd.f32 %v1313, %v1315
  %1319 = vset.pattern.permute.xlu0 2
  %1320 = vperm.xlu0 %1319, %v1116
  %v1321 = vpop.permute.xlu0 %1320
  %1323 = vset.pattern.permute.xlu0 2
  %1324 = vperm.xlu0 %1323, %v1119
  %v1325 = vpop.permute.xlu0 %1324
  %1327 = vset.pattern.permute.xlu0 2
  %1328 = vperm.xlu0 %1327, %v1147
  %v1329 = vpop.permute.xlu0 %1328
  %1331 = vset.pattern.permute.xlu0 2
  %1332 = vperm.xlu0 %1331, %v1149
  %v1333 = vpop.permute.xlu0 %1332
  %v1336 = vsel %vm344, %v267, 0
  %v1339 = vsel %vm344, %v268, 0
  %v1342 = vsel %vm344, %v269, 0
  %v1345 = vsel %vm344, %v270, 0
  %1347 = vmatpush.xpose.msra.mxu0 0.0
  %1348 = vmatpush.xpose.msra.mxu0 0.0
  %1349 = vmatpush.xpose.msra.mxu0 0.0
  %1350 = vmatpush.xpose.msra.mxu0 0.0
  %1351 = vmatpush.xpose.msra.mxu0 0.0
  %1352 = vmatpush.xpose.msra.mxu0 0.0
  %1353 = vmatpush.xpose.msra.mxu0 0.0
  %1354 = vmatpush.xpose.msra.mxu0 0.0
  %1355 = vmatpush.xpose.msra.mxu0 0.0
  %1356 = vmatpush.xpose.msra.mxu0 0.0
  %1357 = vmatpush.xpose.msra.mxu0 0.0
  %1358 = vmatpush.xpose.msra.mxu0 0.0
  %1359 = vmatpush.xpose.msra.mxu0 0.0
  %1360 = vmatpush.xpose.msra.mxu0 0.0
  %1361 = vmatpush.xpose.msra.mxu0 %v1073
  %1362 = vmatpush.xpose.msra.mxu0 %v1070
  %1363 = vmatmul.f32.gmra.mxu0 %v1336
  %v1364 = vpop.f32.mrf.mxu0
  %v1365 = vadd.f32 %v1321, %v1364
  %1366 = vmatmul.f32.gmra.mxu0 %v1339
  %v1367 = vpop.f32.mrf.mxu0
  %v1368 = vadd.f32 %v1325, %v1367
  %1369 = vmatmul.f32.gmra.mxu0 %v1342
  %v1370 = vpop.f32.mrf.mxu0
  %v1371 = vadd.f32 %v1329, %v1370
  %1372 = vmatmul.f32.gmra.mxu0 %v1345
  %v1373 = vpop.f32.mrf.mxu0
  %v1374 = vadd.f32 %v1333, %v1373
  %1375 = vdwg.mxu0
  %v1376 = vmul.f32 %v1365, 0.2
  %v1377 = vmul.f32 %v1368, 0.2
  %v1378 = vmul.f32 %v1371, 0.2
  %v1379 = vmul.f32 %v1374, 0.2
  %v1380 = vmax.f32 %v1365, %v1376
  %v1381 = vmax.f32 %v1368, %v1377
  %v1382 = vmax.f32 %v1371, %v1378
  %v1383 = vmax.f32 %v1374, %v1379
  %v1384 = vadd.f32 %v1380, %v201
  %v1385 = vadd.f32 %v1381, %v202
  %v1386 = vadd.f32 %v1382, %v203
  %v1387 = vadd.f32 %v1383, %v204
  %v1388 = vsel %vm591, %v1384, -inf
  %1389 = vmax.xlane.f32.xlu0 %v1388
  %v1390 = vpop.xlane.xlu0 %1389
  %v1391 = vsel %vm591, %v1385, -inf
  %1392 = vmax.xlane.f32.xlu0 %v1391
  %v1393 = vpop.xlane.xlu0 %1392
  %v1394 = vsel %vm591, %v1386, -inf
  %1395 = vmax.xlane.f32.xlu0 %v1394
  %v1396 = vpop.xlane.xlu0 %1395
  %v1397 = vsel %vm591, %v1387, -inf
  %1398 = vmax.xlane.f32.xlu0 %v1397
  %v1399 = vpop.xlane.xlu0 %1398
  %v1400 = vsub.f32 %v1384, %v1390
  %v1401 = vsub.f32 %v1385, %v1393
  %v1402 = vsub.f32 %v1386, %v1396
  %v1403 = vsub.f32 %v1387, %v1399
  %v1404 = vmul.f32 %v1400, 1.442695
  %v1405 = vpow.pop %v1404
  %v1406 = vmul.f32 %v1401, 1.442695
  %v1407 = vpow.pop %v1406
  %v1408 = vmul.f32 %v1402, 1.442695
  %v1409 = vpow.pop %v1408
  %v1410 = vmul.f32 %v1403, 1.442695
  %v1411 = vpow.pop %v1410
  %v1412 = vmul.f32 %v1405, %v191
  %v1413 = vmul.f32 %v1407, %v192
  %v1414 = vmul.f32 %v1409, %v193
  %v1415 = vmul.f32 %v1411, %v194
  %v1416 = vsel %vm591, %v1412, 0.0
  %1417 = vadd.xlane.f32.xlu0 %v1416
  %v1418 = vpop.xlane.xlu0 %1417
  %v1419 = vsel %vm591, %v1413, 0.0
  %1420 = vadd.xlane.f32.xlu0 %v1419
  %v1421 = vpop.xlane.xlu0 %1420
  %v1422 = vsel %vm591, %v1414, 0.0
  %1423 = vadd.xlane.f32.xlu0 %v1422
  %v1424 = vpop.xlane.xlu0 %1423
  %v1425 = vsel %vm591, %v1415, 0.0
  %1426 = vadd.xlane.f32.xlu0 %v1425
  %v1427 = vpop.xlane.xlu0 %1426
  %v1428 = vmax.f32 %v1418, 1e-16
  %v1429 = vmax.f32 %v1421, 1e-16
  %v1430 = vmax.f32 %v1424, 1e-16
  %v1431 = vmax.f32 %v1427, 1e-16
  %v1432 = vrcp.pop %v1428
  %v1433 = vrcp.pop %v1429
  %v1434 = vrcp.pop %v1430
  %v1435 = vrcp.pop %v1431
  %v1436 = vmul.f32 %v1412, %v1432
  %v1437 = vmul.f32 %v1413, %v1433
  %v1438 = vmul.f32 %v1414, %v1434
  %v1439 = vmul.f32 %v1415, %v1435
  %1442 = vrot.lane.b32.xlu0 %v1093, 64
  %v1443 = vpop.permute.xlu0 %1442
  %1444 = vrot.lane.b32.xlu0 %v1096, 64
  %v1445 = vpop.permute.xlu0 %1444
  %v1449 = vsel %vm591, %v1436, 0
  %v1452 = vsel %vm591, %v1437, 0
  %v1455 = vsel %vm591, %v1438, 0
  %v1458 = vsel %vm591, %v1439, 0
  %1460 = vmatpush.msra.mxu0 0.0
  %1461 = vmatpush.msra.mxu0 0.0
  %1462 = vmatpush.msra.mxu0 0.0
  %1463 = vmatpush.msra.mxu0 0.0
  %1464 = vmatpush.msra.mxu0 0.0
  %1465 = vmatpush.msra.mxu0 0.0
  %1466 = vmatpush.msra.mxu0 0.0
  %1467 = vmatpush.msra.mxu0 0.0
  %1468 = vmatpush.msra.mxu0 0.0
  %1469 = vmatpush.msra.mxu0 0.0
  %1470 = vmatpush.msra.mxu0 0.0
  %1471 = vmatpush.msra.mxu0 0.0
  %1472 = vmatpush.msra.mxu0 0.0
  %1473 = vmatpush.msra.mxu0 0.0
  %1474 = vmatpush.msra.mxu0 %v1445
  %1475 = vmatpush.msra.mxu0 %v1443
  %1476 = vmatmul.f32.gmra.mxu0 %v1449
  %v1477 = vpop.f32.mrf.mxu0
  %v1478 = vadd.f32 0.0, %v1477
  %1479 = vmatmul.f32.gmra.mxu0 %v1452
  %v1480 = vpop.f32.mrf.mxu0
  %v1481 = vadd.f32 0.0, %v1480
  %1482 = vmatmul.f32.gmra.mxu0 %v1455
  %v1483 = vpop.f32.mrf.mxu0
  %v1484 = vadd.f32 0.0, %v1483
  %1485 = vmatmul.f32.gmra.mxu0 %v1458
  %v1486 = vpop.f32.mrf.mxu0
  %v1487 = vadd.f32 0.0, %v1486
  %1488 = vdwg.mxu0
  %v1489 = vsel %vm344, %v1478, %v1484
  %v1490 = vsel %vm344, %v1481, %v1487
  %v1492 = vperm.slane %v275, 0
  %v1494 = vadd.f32 %v1489, %v1492
  %v1495 = vadd.f32 %v1490, %v1492
  %v1496 = vadd.f32 %v1317, %v1494
  %v1497 = vadd.f32 %v1318, %v1495
  %v1499 = vperm.slane %v277, 0
  %v1502 = vsel %vm1010, %v1496, 0
  %v1505 = vsel %vm1010, %v1497, 0
  %1507 = vmatpush.msra.mxu0 0.0
  %1508 = vmatpush.msra.mxu0 0.0
  %1509 = vmatpush.msra.mxu0 0.0
  %1510 = vmatpush.msra.mxu0 0.0
  %1511 = vmatpush.msra.mxu0 0.0
  %1512 = vmatpush.msra.mxu0 0.0
  %1513 = vmatpush.msra.mxu0 0.0
  %1514 = vmatpush.msra.mxu0 0.0
  %1515 = vmatpush.msra.mxu0 %v285
  %1516 = vmatpush.msra.mxu0 %v284
  %1517 = vmatpush.msra.mxu0 %v283
  %1518 = vmatpush.msra.mxu0 %v282
  %1519 = vmatpush.msra.mxu0 %v281
  %1520 = vmatpush.msra.mxu0 %v280
  %1521 = vmatpush.msra.mxu0 %v279
  %1522 = vmatpush.msra.mxu0 %v278
  %1523 = vmatmul.f32.gmra.mxu0 %v1502
  %v1524 = vpop.f32.mrf.mxu0
  %v1525 = vadd.f32 %v1499, %v1524
  %1526 = vmatmul.f32.gmra.mxu0 %v1505
  %v1527 = vpop.f32.mrf.mxu0
  %v1528 = vadd.f32 %v1499, %v1527
  %1529 = vdwg.mxu0
  %v1530 = vmax.f32 %v1525, 0.0
  %v1531 = vmax.f32 %v1528, 0.0
  %v1533 = vperm.slane %v219, 0
  %v1536 = vsel %vm344, %v1530, 0
  %v1539 = vsel %vm344, %v1531, 0
  %1541 = vmatpush.msra.mxu0 0.0
  %1542 = vmatpush.msra.mxu0 0.0
  %1543 = vmatpush.msra.mxu0 0.0
  %1544 = vmatpush.msra.mxu0 0.0
  %1545 = vmatpush.msra.mxu0 0.0
  %1546 = vmatpush.msra.mxu0 0.0
  %1547 = vmatpush.msra.mxu0 0.0
  %1548 = vmatpush.msra.mxu0 0.0
  %1549 = vmatpush.msra.mxu0 0.0
  %1550 = vmatpush.msra.mxu0 0.0
  %1551 = vmatpush.msra.mxu0 0.0
  %1552 = vmatpush.msra.mxu0 0.0
  %1553 = vmatpush.msra.mxu0 %v223
  %1554 = vmatpush.msra.mxu0 %v222
  %1555 = vmatpush.msra.mxu0 %v221
  %1556 = vmatpush.msra.mxu0 %v220
  %1557 = vmatmul.f32.gmra.mxu0 %v1536
  %v1558 = vpop.f32.mrf.mxu0
  %v1559 = vadd.f32 %v1533, %v1558
  %1560 = vmatmul.f32.gmra.mxu0 %v1539
  %v1561 = vpop.f32.mrf.mxu0
  %v1562 = vadd.f32 %v1533, %v1561
  %1563 = vdwg.mxu0
  %v1565 = vperm.slane %v298, 0
  %v1568 = vsel %vm344, %v303, 0
  %1570 = vmatpush.msra.mxu0 0.0
  %1571 = vmatpush.msra.mxu0 0.0
  %1572 = vmatpush.msra.mxu0 0.0
  %1573 = vmatpush.msra.mxu0 0.0
  %1574 = vmatpush.msra.mxu0 0.0
  %1575 = vmatpush.msra.mxu0 0.0
  %1576 = vmatpush.msra.mxu0 0.0
  %1577 = vmatpush.msra.mxu0 0.0
  %1578 = vmatpush.msra.mxu0 0.0
  %1579 = vmatpush.msra.mxu0 0.0
  %1580 = vmatpush.msra.mxu0 0.0
  %1581 = vmatpush.msra.mxu0 0.0
  %1582 = vmatpush.msra.mxu0 %v302
  %1583 = vmatpush.msra.mxu0 %v301
  %1584 = vmatpush.msra.mxu0 %v300
  %1585 = vmatpush.msra.mxu0 %v299
  %1586 = vmatmul.f32.gmra.mxu0 %v1568
  %v1587 = vpop.f32.mrf.mxu0
  %v1588 = vadd.f32 %v1565, %v1587
  %1589 = vdwg.mxu0
  %v1591 = vsel %vm727, %v1559, 0
  %v1594 = vsel %vm727, %v1562, 0
  %v1597 = vsel %vm727, %v1588, 0
  %1599 = vmatpush.xpose.msra.mxu0 0.0
  %1600 = vmatpush.xpose.msra.mxu0 0.0
  %1601 = vmatpush.xpose.msra.mxu0 0.0
  %1602 = vmatpush.xpose.msra.mxu0 0.0
  %1603 = vmatpush.xpose.msra.mxu0 0.0
  %1604 = vmatpush.xpose.msra.mxu0 0.0
  %1605 = vmatpush.xpose.msra.mxu0 0.0
  %1606 = vmatpush.xpose.msra.mxu0 0.0
  %1607 = vmatpush.xpose.msra.mxu0 0.0
  %1608 = vmatpush.xpose.msra.mxu0 0.0
  %1609 = vmatpush.xpose.msra.mxu0 0.0
  %1610 = vmatpush.xpose.msra.mxu0 0.0
  %1611 = vmatpush.xpose.msra.mxu0 0.0
  %1612 = vmatpush.xpose.msra.mxu0 0.0
  %1613 = vmatpush.xpose.msra.mxu0 0.0
  %1614 = vmatpush.xpose.msra.mxu0 %v1597
  %1615 = vmatmul.f32.gmra.mxu0 %v1591
  %v1616 = vpop.f32.mrf.mxu0
  %v1617 = vadd.f32 0.0, %v1616
  %1618 = vmatmul.f32.gmra.mxu0 %v1594
  %v1619 = vpop.f32.mrf.mxu0
  %v1620 = vadd.f32 0.0, %v1619
  %1621 = vdwg.mxu0
  %1624 = vrot.lane.b32.xlu0 %v1617, 8
  %v1625 = vpop.permute.xlu0 %1624
  %1626 = vrot.lane.b32.xlu0 %v1620, 8
  %v1627 = vpop.permute.xlu0 %1626
  %v1630 = vsel %vm727, %v1559, %v1625
  %v1631 = vsel %vm727, %v1562, %v1627
  %1632 = vst.msk [vmem:[%s91] sm:$0xff] %vm591, %v1630
  %1633 = vst.msk [vmem:[%s91 + $0x8] sm:$0xff] %vm591, %v1631
  %1634 = vst.msk [vmem:[%s93] sm:$0xff] %vm727, %v1588
  // Predicated region
  $region182: #{hetero_gnn_forward.1} parent=0 // pred_check
    _
  $region183: #{hetero_gnn_forward.1} parent=0 // pred_check_branch
    %1636 = sbr.rel (0) target = $region185
  $region184: #{hetero_gnn_forward.1} parent=0 // pred_region
    _
  $region185: #{hetero_gnn_forward.1} parent=0 // pred_fallthru
    _
  // Predicated region
  $region186: #{hetero_gnn_forward.1} parent=0 // pred_check
    _
  $region187: #{hetero_gnn_forward.1} parent=0 // pred_check_branch
    %1638 = sbr.rel (0) target = $region189
  $region188: #{hetero_gnn_forward.1} parent=0 // pred_region
    _
  $region189: #{hetero_gnn_forward.1} parent=0 // pred_fallthru
    _
  // Predicated region
  $region190: #{hetero_gnn_forward.1} parent=0 // pred_check
    _
  $region191: #{hetero_gnn_forward.1} parent=0 // pred_check_branch
    %1640 = sbr.rel (0) target = $region193
  $region192: #{hetero_gnn_forward.1} parent=0 // pred_region
    _
  $region193: #{hetero_gnn_forward.1} parent=0 // pred_fallthru
    _
  // Predicated region
  $region194: #{hetero_gnn_forward.1} parent=0 // pred_check
    _
  $region195: #{hetero_gnn_forward.1} parent=0 // pred_check_branch
    %1642 = sbr.rel (0) target = $region197
  $region196: #{hetero_gnn_forward.1} parent=0 // pred_region
    _
  $region197: #{hetero_gnn_forward.1} parent=0 // pred_fallthru
    _

</llo_original>
